<compile_context>
chip_gen: v7x
topology: tpu7x:2x2x1
jax: 0.10.0
libtpu: 0.0.40
codegen_flags: <defaults>
</compile_context>

<pallas_src>
import jax
import jax.numpy as jnp
import numpy as np
from jax import lax
from jax.experimental import pallas as pl
from jax.experimental.pallas import tpu as pltpu

# ---------------- model configuration (matches the module docstring) ----------
B = 2            # batch
HS = WS = 5      # spatial size: (batch, n_states, 5, 5)
K = 3            # kernel_size
N_STATES = 4     # input channels
CHANNELS = 8     # conv channels == GRU input size
N_LAYERS = 2     # GRU layers
HIDDEN = 32      # GRU hidden size
N_ACTIONS = 6    # action logits

PAD = (K - 1) // 2
PH, PW = HS + 2 * PAD, WS + 2 * PAD
PP = PH * PW                                  # padded pixels per image
MAX_TAP = (K - 1) * PW + (K - 1)              # largest tap offset in flat columns
ACC = B * PP - MAX_TAP                        # columns in a conv-layer output
CIN0 = ((N_STATES + 7) // 8) * 8              # layer-1 in-channels padded to sublane multiple
TAPS = [ky * PW + kx for ky in range(K) for kx in range(K)]

N_IN = 12 + 4 * N_LAYERS                      # number of kernel input refs


# ------------------------------- the kernel ----------------------------------
def actor_kernel(*refs):
    x_ref, s_ref, pm_ref = refs[0:3]                       # slab, shift matrix, pool masks
    w1, b1, w2, b2, w3, b3 = refs[3:9]                     # fused conv params
    h0 = refs[9]                                           # (N_LAYERS, B, HIDDEN)
    gru_refs = refs[10:10 + 4 * N_LAYERS]                  # per layer: wih, whh, bih, bhh
    wf, bf = refs[10 + 4 * N_LAYERS], refs[11 + 4 * N_LAYERS]
    probs_out, h_out = refs[N_IN], refs[N_IN + 1]          # outputs

    shift_s = s_ref[...]                                   # (ACC, B*PP) re-pad matrix

    def conv_relu(x_pad, w_ref, b_ref):
        # x_pad: (Cin, B*PP) value in the zero-padded frame; w_ref: (Cout, K*K*Cin).
        # Build the im2col patch matrix (9 lane-shifted slices stacked on sublanes)
        # and do a single MXU matmul instead of 9 accumulated micro-matmuls.
        patches = jnp.concatenate(
            [x_pad[:, t:t + ACC] for t in TAPS], axis=0)   # (K*K*Cin, ACC)
        acc = jnp.dot(w_ref[...], patches,
                      preferred_element_type=jnp.float32) + b_ref[...]
        return jnp.maximum(acc, 0.0)                       # (Cout, ACC)

    # --- CNN: three conv+ReLU layers; re-pad between layers via one matmul each ---
    a1 = conv_relu(x_ref[...], w1, b1)
    a2 = conv_relu(jnp.dot(a1, shift_s, preferred_element_type=jnp.float32), w2, b2)
    a3 = conv_relu(jnp.dot(a2, shift_s, preferred_element_type=jnp.float32), w3, b3)

    # --- global max-pool -> (B, CHANNELS) rows, without any transpose/roll ---
    eye_c = (lax.broadcasted_iota(jnp.int32, (CHANNELS, CHANNELS), 0)
             == lax.broadcasted_iota(jnp.int32, (CHANNELS, CHANNELS), 1)
             ).astype(jnp.float32)
    brow = lax.broadcasted_iota(jnp.int32, (B, 1), 0)
    x = jnp.zeros((B, CHANNELS), jnp.float32)
    for b in range(B):
        # a3 >= 0 after ReLU, so multiplying invalid columns by 0 keeps the max exact.
        col = jnp.max(a3 * pm_ref[b:b + 1, :], axis=1, keepdims=True)   # (C, 1)
        row = jnp.sum(eye_c * col, axis=0, keepdims=True)               # (1, C)
        x = x + jnp.where(brow == b, row, 0.0)                          # place in row b

    # --- stacked GRU, single time step (PyTorch gate order r, z, n) ---
    for l in range(N_LAYERS):
        wih, whh, bih, bhh = gru_refs[4 * l:4 * l + 4]
        hprev = h0[l]                                                   # (B, HIDDEN)
        gi = jnp.dot(x, wih[...], preferred_element_type=jnp.float32) + bih[...]
        gh = jnp.dot(hprev, whh[...], preferred_element_type=jnp.float32) + bhh[...]
        r = 1.0 / (1.0 + jnp.exp(-(gi[:, :HIDDEN] + gh[:, :HIDDEN])))
        z = 1.0 / (1.0 + jnp.exp(-(gi[:, HIDDEN:2 * HIDDEN] + gh[:, HIDDEN:2 * HIDDEN])))
        n = jnp.tanh(gi[:, 2 * HIDDEN:] + r * gh[:, 2 * HIDDEN:])
        hn = (1.0 - z) * n + z * hprev
        h_out[l] = hn
        x = hn

    # --- final linear + softmax (approx EUP reciprocal for the denominator) ---
    logits = jnp.dot(x, wf[...], preferred_element_type=jnp.float32) + bf[...]
    e = jnp.exp(logits - jnp.max(logits, axis=-1, keepdims=True))
    probs_out[...] = e * pl.reciprocal(jnp.sum(e, axis=-1, keepdims=True), approx=True)


# ------------------------- constants / wrapper ---------------------------------
def _build_constants():
    # S: (ACC, B*PP) 0/1 matrix that shifts a top-left-anchored conv output column
    #    back into the interior of the zero-padded frame and zeroes everything else.
    # pool_mask: (B, ACC) 0/1 mask of the valid output columns of each image.
    shift = np.zeros((ACC, B * PP), np.float32)
    pmask = np.zeros((B, ACC), np.float32)
    for b in range(B):
        for y in range(HS):
            for xw in range(WS):
                src = b * PP + y * PW + xw
                dst = b * PP + (y + PAD) * PW + (xw + PAD)
                shift[src, dst] = 1.0
                pmask[b, src] = 1.0
    return jnp.asarray(shift), jnp.asarray(pmask)


_SHIFT_S, _POOL_MASK = _build_constants()

_VMEM = pl.BlockSpec(memory_space=pltpu.MemorySpace.VMEM)

# Tiny, single-grid-point kernel: everything fits in VMEM, so whole-array
# VMEM BlockSpecs with no grid is the right structure (no tiling needed).
_actor_call = pl.pallas_call(
    actor_kernel,
    out_shape=(jax.ShapeDtypeStruct((B, N_ACTIONS), jnp.float32),
               jax.ShapeDtypeStruct((N_LAYERS, B, HIDDEN), jnp.float32)),
    in_specs=[_VMEM] * N_IN,
    out_specs=(_VMEM, _VMEM),
)


def _fuse_conv_w(w, cin_pad):
    # w: (Cout, Cin, K, K) (PyTorch OIHW) -> (Cout, K*K*cin_pad) with columns in
    # tap-major / channel-minor order, matching the in-kernel patch stacking.
    cout, cin = w.shape[0], w.shape[1]
    w = jnp.pad(w, ((0, 0), (0, cin_pad - cin), (0, 0), (0, 0)))
    return jnp.transpose(w, (0, 2, 3, 1)).reshape(cout, K * K * cin_pad)


def actor_forward(x_nchw, h0, params):
    """x_nchw: (B, N_STATES, 5, 5); h0: (N_LAYERS, B, HIDDEN). Returns (probs, h_new)."""
    # NCHW -> zero-padded, channel-major flat slab (CIN0, B*PH*PW): channels on
    # sublanes, flattened padded pixels on lanes (lane-dense working layout).
    x_p = jnp.pad(x_nchw.astype(jnp.float32),
                  ((0, 0), (0, CIN0 - N_STATES), (PAD, PAD), (PAD, PAD)))
    x_cp = jnp.transpose(x_p, (1, 0, 2, 3)).reshape(CIN0, B * PP)

    (cw1, cb1), (cw2, cb2), (cw3, cb3) = params["convs"]
    w1, b1 = _fuse_conv_w(cw1, CIN0), cb1.reshape(-1, 1)
    w2, b2 = _fuse_conv_w(cw2, CHANNELS), cb2.reshape(-1, 1)
    w3, b3 = _fuse_conv_w(cw3, CHANNELS), cb3.reshape(-1, 1)

    gru_flat = []
    for (w_ih, w_hh, b_ih, b_hh) in params["gru"]:
        gru_flat += [w_ih.T, w_hh.T, b_ih.reshape(1, -1), b_hh.reshape(1, -1)]

    wf = params["final"][0].T
    bf = params["final"][1].reshape(1, -1)

    inputs = ([x_cp, _SHIFT_S, _POOL_MASK, w1, b1, w2, b2, w3, b3, h0]
              + gru_flat + [wf, bf])
    return _actor_call(*inputs)


# --------------------------- pure-JAX reference --------------------------------
def ref_forward(x_nchw, h0, params):
    x = jnp.transpose(x_nchw, (0, 2, 3, 1)).astype(jnp.float32)
    for (w, b) in params["convs"]:                         # w: (Cout, Cin, K, K)
        w_hwio = jnp.transpose(w, (2, 3, 1, 0))
        x = lax.conv_general_dilated(x, w_hwio, (1, 1), "SAME",
                                     dimension_numbers=("NHWC", "HWIO", "NHWC"))
        x = jnp.maximum(x + b.reshape(1, 1, 1, -1), 0.0)
    cur = jnp.max(x, axis=(1, 2))                          # global max pool -> (B, C)
    hs = []
    for l in range(N_LAYERS):
        w_ih, w_hh, b_ih, b_hh = params["gru"][l]
        gi = cur @ w_ih.T + b_ih
        gh = h0[l] @ w_hh.T + b_hh
        r = jax.nn.sigmoid(gi[:, :HIDDEN] + gh[:, :HIDDEN])
        z = jax.nn.sigmoid(gi[:, HIDDEN:2 * HIDDEN] + gh[:, HIDDEN:2 * HIDDEN])
        n = jnp.tanh(gi[:, 2 * HIDDEN:] + r * gh[:, 2 * HIDDEN:])
        hn = (1.0 - z) * n + z * h0[l]
        hs.append(hn)
        cur = hn
    wf, bf = params["final"]
    probs = jax.nn.softmax(cur @ wf.T + bf, axis=-1)
    return probs, jnp.stack(hs)


# --------------------------------- main ----------------------------------------
if __name__ == "__main__":
    key = jax.random.PRNGKey(0)
    keys = iter(jax.random.split(key, 64))

    def rnd(shape, scale=0.2):
        return (scale * jax.random.normal(next(keys), shape)).astype(jnp.float32)

    # parameters in PyTorch-native layouts
    convs = [
        (rnd((CHANNELS, N_STATES, K, K)), rnd((CHANNELS,))),
        (rnd((CHANNELS, CHANNELS, K, K)), rnd((CHANNELS,))),
        (rnd((CHANNELS, CHANNELS, K, K)), rnd((CHANNELS,))),
    ]
    gru = []
    for l in range(N_LAYERS):
        in_dim = CHANNELS if l == 0 else HIDDEN
        gru.append((rnd((3 * HIDDEN, in_dim)), rnd((3 * HIDDEN, HIDDEN)),
                    rnd((3 * HIDDEN,)), rnd((3 * HIDDEN,))))
    final = (rnd((N_ACTIONS, HIDDEN)), rnd((N_ACTIONS,)))
    params = {"convs": convs, "gru": gru, "final": final}

    x = jax.random.normal(next(keys), (B, N_STATES, HS, WS), jnp.float32)
    h0 = (0.1 * jax.random.normal(next(keys), (N_LAYERS, B, HIDDEN))).astype(jnp.float32)

    probs_k, h_k = actor_forward(x, h0, params)
    jax.block_until_ready((probs_k, h_k))

    probs_r, h_r = ref_forward(x, h0, params)
    np.testing.assert_allclose(np.asarray(h_k), np.asarray(h_r), rtol=1e-4, atol=1e-4)
    np.testing.assert_allclose(np.asarray(probs_k), np.asarray(probs_r),
                               rtol=1e-3, atol=1e-3)
    print("KERNEL_OK")
</pallas_src>

<mosaic_0001>
module attributes {stable_mosaic.version = 11 : i64} {
  func.func @actor_kernel(%arg0: memref<8x98xf32, #tpu.memory_space<vmem>>, %arg1: memref<82x98xf32, #tpu.memory_space<vmem>>, %arg2: memref<2x82xf32, #tpu.memory_space<vmem>>, %arg3: memref<8x72xf32, #tpu.memory_space<vmem>>, %arg4: memref<8x1xf32, #tpu.memory_space<vmem>>, %arg5: memref<8x72xf32, #tpu.memory_space<vmem>>, %arg6: memref<8x1xf32, #tpu.memory_space<vmem>>, %arg7: memref<8x72xf32, #tpu.memory_space<vmem>>, %arg8: memref<8x1xf32, #tpu.memory_space<vmem>>, %arg9: memref<2x2x32xf32, #tpu.memory_space<vmem>>, %arg10: memref<8x96xf32, #tpu.memory_space<vmem>>, %arg11: memref<32x96xf32, #tpu.memory_space<vmem>>, %arg12: memref<1x96xf32, #tpu.memory_space<vmem>>, %arg13: memref<1x96xf32, #tpu.memory_space<vmem>>, %arg14: memref<32x96xf32, #tpu.memory_space<vmem>>, %arg15: memref<32x96xf32, #tpu.memory_space<vmem>>, %arg16: memref<1x96xf32, #tpu.memory_space<vmem>>, %arg17: memref<1x96xf32, #tpu.memory_space<vmem>>, %arg18: memref<32x6xf32, #tpu.memory_space<vmem>>, %arg19: memref<1x6xf32, #tpu.memory_space<vmem>>, %arg20: memref<2x6xf32, #tpu.memory_space<vmem>>, %arg21: memref<2x2x32xf32, #tpu.memory_space<vmem>>) attributes {dimension_semantics = [], scalar_prefetch = 0 : i64, scratch_operands = 0 : i64, tpu.core_type = #tpu.core_type<tc>} {
    %c0 = arith.constant 0 : index
    %c0_0 = arith.constant 0 : index
    %0 = vector.load %arg1[%c0, %c0_0] : memref<82x98xf32, #tpu.memory_space<vmem>>, vector<82x98xf32>
    %c0_1 = arith.constant 0 : index
    %c0_2 = arith.constant 0 : index
    %1 = vector.load %arg0[%c0_1, %c0_2] : memref<8x98xf32, #tpu.memory_space<vmem>>, vector<8x98xf32>
    %2 = vector.extract_strided_slice %1 {offsets = [0, 0], sizes = [8, 82], strides = [1, 1]} : vector<8x98xf32> to vector<8x82xf32>
    %3 = vector.extract_strided_slice %1 {offsets = [0, 1], sizes = [8, 82], strides = [1, 1]} : vector<8x98xf32> to vector<8x82xf32>
    %4 = vector.extract_strided_slice %1 {offsets = [0, 2], sizes = [8, 82], strides = [1, 1]} : vector<8x98xf32> to vector<8x82xf32>
    %5 = vector.extract_strided_slice %1 {offsets = [0, 7], sizes = [8, 82], strides = [1, 1]} : vector<8x98xf32> to vector<8x82xf32>
    %6 = vector.extract_strided_slice %1 {offsets = [0, 8], sizes = [8, 82], strides = [1, 1]} : vector<8x98xf32> to vector<8x82xf32>
    %7 = vector.extract_strided_slice %1 {offsets = [0, 9], sizes = [8, 82], strides = [1, 1]} : vector<8x98xf32> to vector<8x82xf32>
    %8 = vector.extract_strided_slice %1 {offsets = [0, 14], sizes = [8, 82], strides = [1, 1]} : vector<8x98xf32> to vector<8x82xf32>
    %9 = vector.extract_strided_slice %1 {offsets = [0, 15], sizes = [8, 82], strides = [1, 1]} : vector<8x98xf32> to vector<8x82xf32>
    %10 = vector.extract_strided_slice %1 {offsets = [0, 16], sizes = [8, 82], strides = [1, 1]} : vector<8x98xf32> to vector<8x82xf32>
    %11 = tpu.concatenate %2, %3, %4, %5, %6, %7, %8, %9, %10 in 0 : vector<8x82xf32>, vector<8x82xf32>, vector<8x82xf32>, vector<8x82xf32>, vector<8x82xf32>, vector<8x82xf32>, vector<8x82xf32>, vector<8x82xf32>, vector<8x82xf32> -> vector<72x82xf32>
    %c0_3 = arith.constant 0 : index
    %c0_4 = arith.constant 0 : index
    %12 = vector.load %arg3[%c0_3, %c0_4] : memref<8x72xf32, #tpu.memory_space<vmem>>, vector<8x72xf32>
    %cst = arith.constant dense<0.000000e+00> : vector<8x82xf32>
    %13 = tpu.matmul %12, %11, %cst {dimension_numbers = #tpu.dot_dimension_numbers<[1], [0], [0], [1], [0, 0, 1, 1], [], []>} : vector<8x72xf32>, vector<72x82xf32>, vector<8x82xf32> -> vector<8x82xf32>
    %c0_5 = arith.constant 0 : index
    %c0_6 = arith.constant 0 : index
    %14 = vector.load %arg4[%c0_5, %c0_6] : memref<8x1xf32, #tpu.memory_space<vmem>>, vector<8x1xf32>
    %15 = vector.broadcast %14 : vector<8x1xf32> to vector<8x82xf32>
    %16 = arith.addf %13, %15 : vector<8x82xf32>
    %cst_7 = arith.constant 0.000000e+00 : f32
    %17 = vector.broadcast %cst_7 : f32 to vector<8x82xf32>
    %18 = arith.maximumf %16, %17 : vector<8x82xf32>
    %cst_8 = arith.constant dense<0.000000e+00> : vector<8x98xf32>
    %19 = tpu.matmul %18, %0, %cst_8 {dimension_numbers = #tpu.dot_dimension_numbers<[1], [0], [0], [1], [0, 0, 1, 1], [], []>} : vector<8x82xf32>, vector<82x98xf32>, vector<8x98xf32> -> vector<8x98xf32>
    %20 = vector.extract_strided_slice %19 {offsets = [0, 0], sizes = [8, 82], strides = [1, 1]} : vector<8x98xf32> to vector<8x82xf32>
    %21 = vector.extract_strided_slice %19 {offsets = [0, 1], sizes = [8, 82], strides = [1, 1]} : vector<8x98xf32> to vector<8x82xf32>
    %22 = vector.extract_strided_slice %19 {offsets = [0, 2], sizes = [8, 82], strides = [1, 1]} : vector<8x98xf32> to vector<8x82xf32>
    %23 = vector.extract_strided_slice %19 {offsets = [0, 7], sizes = [8, 82], strides = [1, 1]} : vector<8x98xf32> to vector<8x82xf32>
    %24 = vector.extract_strided_slice %19 {offsets = [0, 8], sizes = [8, 82], strides = [1, 1]} : vector<8x98xf32> to vector<8x82xf32>
    %25 = vector.extract_strided_slice %19 {offsets = [0, 9], sizes = [8, 82], strides = [1, 1]} : vector<8x98xf32> to vector<8x82xf32>
    %26 = vector.extract_strided_slice %19 {offsets = [0, 14], sizes = [8, 82], strides = [1, 1]} : vector<8x98xf32> to vector<8x82xf32>
    %27 = vector.extract_strided_slice %19 {offsets = [0, 15], sizes = [8, 82], strides = [1, 1]} : vector<8x98xf32> to vector<8x82xf32>
    %28 = vector.extract_strided_slice %19 {offsets = [0, 16], sizes = [8, 82], strides = [1, 1]} : vector<8x98xf32> to vector<8x82xf32>
    %29 = tpu.concatenate %20, %21, %22, %23, %24, %25, %26, %27, %28 in 0 : vector<8x82xf32>, vector<8x82xf32>, vector<8x82xf32>, vector<8x82xf32>, vector<8x82xf32>, vector<8x82xf32>, vector<8x82xf32>, vector<8x82xf32>, vector<8x82xf32> -> vector<72x82xf32>
    %c0_9 = arith.constant 0 : index
    %c0_10 = arith.constant 0 : index
    %30 = vector.load %arg5[%c0_9, %c0_10] : memref<8x72xf32, #tpu.memory_space<vmem>>, vector<8x72xf32>
    %cst_11 = arith.constant dense<0.000000e+00> : vector<8x82xf32>
    %31 = tpu.matmul %30, %29, %cst_11 {dimension_numbers = #tpu.dot_dimension_numbers<[1], [0], [0], [1], [0, 0, 1, 1], [], []>} : vector<8x72xf32>, vector<72x82xf32>, vector<8x82xf32> -> vector<8x82xf32>
    %c0_12 = arith.constant 0 : index
    %c0_13 = arith.constant 0 : index
    %32 = vector.load %arg6[%c0_12, %c0_13] : memref<8x1xf32, #tpu.memory_space<vmem>>, vector<8x1xf32>
    %33 = vector.broadcast %32 : vector<8x1xf32> to vector<8x82xf32>
    %34 = arith.addf %31, %33 : vector<8x82xf32>
    %cst_14 = arith.constant 0.000000e+00 : f32
    %35 = vector.broadcast %cst_14 : f32 to vector<8x82xf32>
    %36 = arith.maximumf %34, %35 : vector<8x82xf32>
    %cst_15 = arith.constant dense<0.000000e+00> : vector<8x98xf32>
    %37 = tpu.matmul %36, %0, %cst_15 {dimension_numbers = #tpu.dot_dimension_numbers<[1], [0], [0], [1], [0, 0, 1, 1], [], []>} : vector<8x82xf32>, vector<82x98xf32>, vector<8x98xf32> -> vector<8x98xf32>
    %38 = vector.extract_strided_slice %37 {offsets = [0, 0], sizes = [8, 82], strides = [1, 1]} : vector<8x98xf32> to vector<8x82xf32>
    %39 = vector.extract_strided_slice %37 {offsets = [0, 1], sizes = [8, 82], strides = [1, 1]} : vector<8x98xf32> to vector<8x82xf32>
    %40 = vector.extract_strided_slice %37 {offsets = [0, 2], sizes = [8, 82], strides = [1, 1]} : vector<8x98xf32> to vector<8x82xf32>
    %41 = vector.extract_strided_slice %37 {offsets = [0, 7], sizes = [8, 82], strides = [1, 1]} : vector<8x98xf32> to vector<8x82xf32>
    %42 = vector.extract_strided_slice %37 {offsets = [0, 8], sizes = [8, 82], strides = [1, 1]} : vector<8x98xf32> to vector<8x82xf32>
    %43 = vector.extract_strided_slice %37 {offsets = [0, 9], sizes = [8, 82], strides = [1, 1]} : vector<8x98xf32> to vector<8x82xf32>
    %44 = vector.extract_strided_slice %37 {offsets = [0, 14], sizes = [8, 82], strides = [1, 1]} : vector<8x98xf32> to vector<8x82xf32>
    %45 = vector.extract_strided_slice %37 {offsets = [0, 15], sizes = [8, 82], strides = [1, 1]} : vector<8x98xf32> to vector<8x82xf32>
    %46 = vector.extract_strided_slice %37 {offsets = [0, 16], sizes = [8, 82], strides = [1, 1]} : vector<8x98xf32> to vector<8x82xf32>
    %47 = tpu.concatenate %38, %39, %40, %41, %42, %43, %44, %45, %46 in 0 : vector<8x82xf32>, vector<8x82xf32>, vector<8x82xf32>, vector<8x82xf32>, vector<8x82xf32>, vector<8x82xf32>, vector<8x82xf32>, vector<8x82xf32>, vector<8x82xf32> -> vector<72x82xf32>
    %c0_16 = arith.constant 0 : index
    %c0_17 = arith.constant 0 : index
    %48 = vector.load %arg7[%c0_16, %c0_17] : memref<8x72xf32, #tpu.memory_space<vmem>>, vector<8x72xf32>
    %cst_18 = arith.constant dense<0.000000e+00> : vector<8x82xf32>
    %49 = tpu.matmul %48, %47, %cst_18 {dimension_numbers = #tpu.dot_dimension_numbers<[1], [0], [0], [1], [0, 0, 1, 1], [], []>} : vector<8x72xf32>, vector<72x82xf32>, vector<8x82xf32> -> vector<8x82xf32>
    %c0_19 = arith.constant 0 : index
    %c0_20 = arith.constant 0 : index
    %50 = vector.load %arg8[%c0_19, %c0_20] : memref<8x1xf32, #tpu.memory_space<vmem>>, vector<8x1xf32>
    %51 = vector.broadcast %50 : vector<8x1xf32> to vector<8x82xf32>
    %52 = arith.addf %49, %51 : vector<8x82xf32>
    %cst_21 = arith.constant 0.000000e+00 : f32
    %53 = vector.broadcast %cst_21 : f32 to vector<8x82xf32>
    %54 = arith.maximumf %52, %53 : vector<8x82xf32>
    %55 = tpu.iota {dimensions = array<i32: 0>} : vector<8x8xi32>
    %56 = tpu.iota {dimensions = array<i32: 1>} : vector<8x8xi32>
    %57 = arith.cmpi eq, %55, %56 : vector<8x8xi32>
    %58 = arith.extui %57 : vector<8x8xi1> to vector<8x8xi32>
    %59 = arith.sitofp %58 : vector<8x8xi32> to vector<8x8xf32>
    %60 = tpu.iota {dimensions = array<i32: 0>} : vector<2x1xi32>
    %cst_22 = arith.constant 0.000000e+00 : f32
    %61 = vector.broadcast %cst_22 : f32 to vector<2x8xf32>
    %c0_23 = arith.constant 0 : index
    %c0_24 = arith.constant 0 : index
    %62 = vector.load %arg2[%c0_23, %c0_24] : memref<2x82xf32, #tpu.memory_space<vmem>>, vector<1x82xf32>
    %63 = vector.broadcast %62 : vector<1x82xf32> to vector<8x82xf32>
    %64 = arith.mulf %54, %63 : vector<8x82xf32>
    %cst_25 = arith.constant dense<0xFF800000> : vector<8xf32>
    %65 = vector.multi_reduction <maximumf>, %64, %cst_25 [1] : vector<8x82xf32> to vector<8xf32>
    %66 = vector.shape_cast %65 : vector<8xf32> to vector<8x1xf32>
    %67 = vector.broadcast %66 : vector<8x1xf32> to vector<8x8xf32>
    %68 = arith.mulf %59, %67 : vector<8x8xf32>
    %cst_26 = arith.constant dense<0.000000e+00> : vector<8xf32>
    %69 = vector.multi_reduction <add>, %68, %cst_26 [0] : vector<8x8xf32> to vector<8xf32>
    %70 = vector.shape_cast %69 : vector<8xf32> to vector<1x8xf32>
    %c0_i32 = arith.constant 0 : i32
    %71 = vector.broadcast %c0_i32 : i32 to vector<2x1xi32>
    %72 = arith.cmpi eq, %60, %71 : vector<2x1xi32>
    %cst_27 = arith.constant 0.000000e+00 : f32
    %73 = vector.shape_cast %72 : vector<2x1xi1> to vector<2x1xi1>
    %74 = vector.broadcast %73 : vector<2x1xi1> to vector<2x8xi1>
    %75 = vector.shape_cast %70 : vector<1x8xf32> to vector<1x8xf32>
    %76 = vector.broadcast %75 : vector<1x8xf32> to vector<2x8xf32>
    %77 = vector.broadcast %cst_27 : f32 to vector<2x8xf32>
    %78 = arith.select %74, %76, %77 : vector<2x8xi1>, vector<2x8xf32>
    %79 = arith.addf %61, %78 : vector<2x8xf32>
    %c1 = arith.constant 1 : index
    %c0_28 = arith.constant 0 : index
    %80 = vector.load %arg2[%c1, %c0_28] : memref<2x82xf32, #tpu.memory_space<vmem>>, vector<1x82xf32>
    %81 = vector.broadcast %80 : vector<1x82xf32> to vector<8x82xf32>
    %82 = arith.mulf %54, %81 : vector<8x82xf32>
    %cst_29 = arith.constant dense<0xFF800000> : vector<8xf32>
    %83 = vector.multi_reduction <maximumf>, %82, %cst_29 [1] : vector<8x82xf32> to vector<8xf32>
    %84 = vector.shape_cast %83 : vector<8xf32> to vector<8x1xf32>
    %85 = vector.broadcast %84 : vector<8x1xf32> to vector<8x8xf32>
    %86 = arith.mulf %59, %85 : vector<8x8xf32>
    %cst_30 = arith.constant dense<0.000000e+00> : vector<8xf32>
    %87 = vector.multi_reduction <add>, %86, %cst_30 [0] : vector<8x8xf32> to vector<8xf32>
    %88 = vector.shape_cast %87 : vector<8xf32> to vector<1x8xf32>
    %c1_i32 = arith.constant 1 : i32
    %89 = vector.broadcast %c1_i32 : i32 to vector<2x1xi32>
    %90 = arith.cmpi eq, %60, %89 : vector<2x1xi32>
    %cst_31 = arith.constant 0.000000e+00 : f32
    %91 = vector.shape_cast %90 : vector<2x1xi1> to vector<2x1xi1>
    %92 = vector.broadcast %91 : vector<2x1xi1> to vector<2x8xi1>
    %93 = vector.shape_cast %88 : vector<1x8xf32> to vector<1x8xf32>
    %94 = vector.broadcast %93 : vector<1x8xf32> to vector<2x8xf32>
    %95 = vector.broadcast %cst_31 : f32 to vector<2x8xf32>
    %96 = arith.select %92, %94, %95 : vector<2x8xi1>, vector<2x8xf32>
    %97 = arith.addf %79, %96 : vector<2x8xf32>
    %c0_32 = arith.constant 0 : index
    %c0_33 = arith.constant 0 : index
    %c0_34 = arith.constant 0 : index
    %98 = vector.load %arg9[%c0_32, %c0_33, %c0_34] : memref<2x2x32xf32, #tpu.memory_space<vmem>>, vector<1x2x32xf32>
    %99 = vector.shape_cast %98 : vector<1x2x32xf32> to vector<2x32xf32>
    %c0_35 = arith.constant 0 : index
    %c0_36 = arith.constant 0 : index
    %100 = vector.load %arg10[%c0_35, %c0_36] : memref<8x96xf32, #tpu.memory_space<vmem>>, vector<8x96xf32>
    %cst_37 = arith.constant dense<0.000000e+00> : vector<2x96xf32>
    %101 = tpu.matmul %97, %100, %cst_37 {dimension_numbers = #tpu.dot_dimension_numbers<[1], [0], [0], [1], [0, 0, 1, 1], [], []>} : vector<2x8xf32>, vector<8x96xf32>, vector<2x96xf32> -> vector<2x96xf32>
    %c0_38 = arith.constant 0 : index
    %c0_39 = arith.constant 0 : index
    %102 = vector.load %arg12[%c0_38, %c0_39] : memref<1x96xf32, #tpu.memory_space<vmem>>, vector<1x96xf32>
    %103 = vector.broadcast %102 : vector<1x96xf32> to vector<2x96xf32>
    %104 = arith.addf %101, %103 : vector<2x96xf32>
    %c0_40 = arith.constant 0 : index
    %c0_41 = arith.constant 0 : index
    %105 = vector.load %arg11[%c0_40, %c0_41] : memref<32x96xf32, #tpu.memory_space<vmem>>, vector<32x96xf32>
    %cst_42 = arith.constant dense<0.000000e+00> : vector<2x96xf32>
    %106 = tpu.matmul %99, %105, %cst_42 {dimension_numbers = #tpu.dot_dimension_numbers<[1], [0], [0], [1], [0, 0, 1, 1], [], []>} : vector<2x32xf32>, vector<32x96xf32>, vector<2x96xf32> -> vector<2x96xf32>
    %c0_43 = arith.constant 0 : index
    %c0_44 = arith.constant 0 : index
    %107 = vector.load %arg13[%c0_43, %c0_44] : memref<1x96xf32, #tpu.memory_space<vmem>>, vector<1x96xf32>
    %108 = vector.broadcast %107 : vector<1x96xf32> to vector<2x96xf32>
    %109 = arith.addf %106, %108 : vector<2x96xf32>
    %110 = vector.extract_strided_slice %104 {offsets = [0, 0], sizes = [2, 32], strides = [1, 1]} : vector<2x96xf32> to vector<2x32xf32>
    %111 = vector.extract_strided_slice %109 {offsets = [0, 0], sizes = [2, 32], strides = [1, 1]} : vector<2x96xf32> to vector<2x32xf32>
    %112 = arith.addf %110, %111 : vector<2x32xf32>
    %cst_45 = arith.constant 0.000000e+00 : f32
    %113 = vector.broadcast %cst_45 : f32 to vector<2x32xf32>
    %114 = arith.subf %113, %112 : vector<2x32xf32>
    %115 = math.exp %114 : vector<2x32xf32>
    %cst_46 = arith.constant 1.000000e+00 : f32
    %116 = vector.broadcast %cst_46 : f32 to vector<2x32xf32>
    %117 = arith.addf %116, %115 : vector<2x32xf32>
    %cst_47 = arith.constant 1.000000e+00 : f32
    %118 = vector.broadcast %cst_47 : f32 to vector<2x32xf32>
    %119 = arith.divf %118, %117 : vector<2x32xf32>
    %120 = vector.extract_strided_slice %104 {offsets = [0, 32], sizes = [2, 32], strides = [1, 1]} : vector<2x96xf32> to vector<2x32xf32>
    %121 = vector.extract_strided_slice %109 {offsets = [0, 32], sizes = [2, 32], strides = [1, 1]} : vector<2x96xf32> to vector<2x32xf32>
    %122 = arith.addf %120, %121 : vector<2x32xf32>
    %cst_48 = arith.constant 0.000000e+00 : f32
    %123 = vector.broadcast %cst_48 : f32 to vector<2x32xf32>
    %124 = arith.subf %123, %122 : vector<2x32xf32>
    %125 = math.exp %124 : vector<2x32xf32>
    %cst_49 = arith.constant 1.000000e+00 : f32
    %126 = vector.broadcast %cst_49 : f32 to vector<2x32xf32>
    %127 = arith.addf %126, %125 : vector<2x32xf32>
    %cst_50 = arith.constant 1.000000e+00 : f32
    %128 = vector.broadcast %cst_50 : f32 to vector<2x32xf32>
    %129 = arith.divf %128, %127 : vector<2x32xf32>
    %130 = vector.extract_strided_slice %104 {offsets = [0, 64], sizes = [2, 32], strides = [1, 1]} : vector<2x96xf32> to vector<2x32xf32>
    %131 = vector.extract_strided_slice %109 {offsets = [0, 64], sizes = [2, 32], strides = [1, 1]} : vector<2x96xf32> to vector<2x32xf32>
    %132 = arith.mulf %119, %131 : vector<2x32xf32>
    %133 = arith.addf %130, %132 : vector<2x32xf32>
    %134 = math.tanh %133 : vector<2x32xf32>
    %cst_51 = arith.constant 1.000000e+00 : f32
    %135 = vector.broadcast %cst_51 : f32 to vector<2x32xf32>
    %136 = arith.subf %135, %129 : vector<2x32xf32>
    %137 = arith.mulf %136, %134 : vector<2x32xf32>
    %138 = arith.mulf %129, %99 : vector<2x32xf32>
    %139 = arith.addf %137, %138 : vector<2x32xf32>
    %c0_52 = arith.constant 0 : index
    %c0_53 = arith.constant 0 : index
    %c0_54 = arith.constant 0 : index
    %140 = vector.load %arg21[%c0_52, %c0_53, %c0_54] : memref<2x2x32xf32, #tpu.memory_space<vmem>>, vector<1x2x32xf32>
    %141 = vector.shape_cast %140 : vector<1x2x32xf32> to vector<2x32xf32>
    %142 = vector.shape_cast %139 : vector<2x32xf32> to vector<1x2x32xf32>
    tpu.vector_store %arg21[%c0_52, %c0_53, %c0_54], %142 {strides = array<i32>} : memref<2x2x32xf32, #tpu.memory_space<vmem>>, vector<1x2x32xf32>,
    %c1_55 = arith.constant 1 : index
    %c0_56 = arith.constant 0 : index
    %c0_57 = arith.constant 0 : index
    %143 = vector.load %arg9[%c1_55, %c0_56, %c0_57] : memref<2x2x32xf32, #tpu.memory_space<vmem>>, vector<1x2x32xf32>
    %144 = vector.shape_cast %143 : vector<1x2x32xf32> to vector<2x32xf32>
    %c0_58 = arith.constant 0 : index
    %c0_59 = arith.constant 0 : index
    %145 = vector.load %arg14[%c0_58, %c0_59] : memref<32x96xf32, #tpu.memory_space<vmem>>, vector<32x96xf32>
    %cst_60 = arith.constant dense<0.000000e+00> : vector<2x96xf32>
    %146 = tpu.matmul %139, %145, %cst_60 {dimension_numbers = #tpu.dot_dimension_numbers<[1], [0], [0], [1], [0, 0, 1, 1], [], []>} : vector<2x32xf32>, vector<32x96xf32>, vector<2x96xf32> -> vector<2x96xf32>
    %c0_61 = arith.constant 0 : index
    %c0_62 = arith.constant 0 : index
    %147 = vector.load %arg16[%c0_61, %c0_62] : memref<1x96xf32, #tpu.memory_space<vmem>>, vector<1x96xf32>
    %148 = vector.broadcast %147 : vector<1x96xf32> to vector<2x96xf32>
    %149 = arith.addf %146, %148 : vector<2x96xf32>
    %c0_63 = arith.constant 0 : index
    %c0_64 = arith.constant 0 : index
    %150 = vector.load %arg15[%c0_63, %c0_64] : memref<32x96xf32, #tpu.memory_space<vmem>>, vector<32x96xf32>
    %cst_65 = arith.constant dense<0.000000e+00> : vector<2x96xf32>
    %151 = tpu.matmul %144, %150, %cst_65 {dimension_numbers = #tpu.dot_dimension_numbers<[1], [0], [0], [1], [0, 0, 1, 1], [], []>} : vector<2x32xf32>, vector<32x96xf32>, vector<2x96xf32> -> vector<2x96xf32>
    %c0_66 = arith.constant 0 : index
    %c0_67 = arith.constant 0 : index
    %152 = vector.load %arg17[%c0_66, %c0_67] : memref<1x96xf32, #tpu.memory_space<vmem>>, vector<1x96xf32>
    %153 = vector.broadcast %152 : vector<1x96xf32> to vector<2x96xf32>
    %154 = arith.addf %151, %153 : vector<2x96xf32>
    %155 = vector.extract_strided_slice %149 {offsets = [0, 0], sizes = [2, 32], strides = [1, 1]} : vector<2x96xf32> to vector<2x32xf32>
    %156 = vector.extract_strided_slice %154 {offsets = [0, 0], sizes = [2, 32], strides = [1, 1]} : vector<2x96xf32> to vector<2x32xf32>
    %157 = arith.addf %155, %156 : vector<2x32xf32>
    %cst_68 = arith.constant 0.000000e+00 : f32
    %158 = vector.broadcast %cst_68 : f32 to vector<2x32xf32>
    %159 = arith.subf %158, %157 : vector<2x32xf32>
    %160 = math.exp %159 : vector<2x32xf32>
    %cst_69 = arith.constant 1.000000e+00 : f32
    %161 = vector.broadcast %cst_69 : f32 to vector<2x32xf32>
    %162 = arith.addf %161, %160 : vector<2x32xf32>
    %cst_70 = arith.constant 1.000000e+00 : f32
    %163 = vector.broadcast %cst_70 : f32 to vector<2x32xf32>
    %164 = arith.divf %163, %162 : vector<2x32xf32>
    %165 = vector.extract_strided_slice %149 {offsets = [0, 32], sizes = [2, 32], strides = [1, 1]} : vector<2x96xf32> to vector<2x32xf32>
    %166 = vector.extract_strided_slice %154 {offsets = [0, 32], sizes = [2, 32], strides = [1, 1]} : vector<2x96xf32> to vector<2x32xf32>
    %167 = arith.addf %165, %166 : vector<2x32xf32>
    %cst_71 = arith.constant 0.000000e+00 : f32
    %168 = vector.broadcast %cst_71 : f32 to vector<2x32xf32>
    %169 = arith.subf %168, %167 : vector<2x32xf32>
    %170 = math.exp %169 : vector<2x32xf32>
    %cst_72 = arith.constant 1.000000e+00 : f32
    %171 = vector.broadcast %cst_72 : f32 to vector<2x32xf32>
    %172 = arith.addf %171, %170 : vector<2x32xf32>
    %cst_73 = arith.constant 1.000000e+00 : f32
    %173 = vector.broadcast %cst_73 : f32 to vector<2x32xf32>
    %174 = arith.divf %173, %172 : vector<2x32xf32>
    %175 = vector.extract_strided_slice %149 {offsets = [0, 64], sizes = [2, 32], strides = [1, 1]} : vector<2x96xf32> to vector<2x32xf32>
    %176 = vector.extract_strided_slice %154 {offsets = [0, 64], sizes = [2, 32], strides = [1, 1]} : vector<2x96xf32> to vector<2x32xf32>
    %177 = arith.mulf %164, %176 : vector<2x32xf32>
    %178 = arith.addf %175, %177 : vector<2x32xf32>
    %179 = math.tanh %178 : vector<2x32xf32>
    %cst_74 = arith.constant 1.000000e+00 : f32
    %180 = vector.broadcast %cst_74 : f32 to vector<2x32xf32>
    %181 = arith.subf %180, %174 : vector<2x32xf32>
    %182 = arith.mulf %181, %179 : vector<2x32xf32>
    %183 = arith.mulf %174, %144 : vector<2x32xf32>
    %184 = arith.addf %182, %183 : vector<2x32xf32>
    %c1_75 = arith.constant 1 : index
    %c0_76 = arith.constant 0 : index
    %c0_77 = arith.constant 0 : index
    %185 = vector.load %arg21[%c1_75, %c0_76, %c0_77] : memref<2x2x32xf32, #tpu.memory_space<vmem>>, vector<1x2x32xf32>
    %186 = vector.shape_cast %185 : vector<1x2x32xf32> to vector<2x32xf32>
    %187 = vector.shape_cast %184 : vector<2x32xf32> to vector<1x2x32xf32>
    tpu.vector_store %arg21[%c1_75, %c0_76, %c0_77], %187 {strides = array<i32>} : memref<2x2x32xf32, #tpu.memory_space<vmem>>, vector<1x2x32xf32>,
    %c0_78 = arith.constant 0 : index
    %c0_79 = arith.constant 0 : index
    %188 = vector.load %arg18[%c0_78, %c0_79] : memref<32x6xf32, #tpu.memory_space<vmem>>, vector<32x6xf32>
    %cst_80 = arith.constant dense<0.000000e+00> : vector<2x6xf32>
    %189 = tpu.matmul %184, %188, %cst_80 {dimension_numbers = #tpu.dot_dimension_numbers<[1], [0], [0], [1], [0, 0, 1, 1], [], []>} : vector<2x32xf32>, vector<32x6xf32>, vector<2x6xf32> -> vector<2x6xf32>
    %c0_81 = arith.constant 0 : index
    %c0_82 = arith.constant 0 : index
    %190 = vector.load %arg19[%c0_81, %c0_82] : memref<1x6xf32, #tpu.memory_space<vmem>>, vector<1x6xf32>
    %191 = vector.broadcast %190 : vector<1x6xf32> to vector<2x6xf32>
    %192 = arith.addf %189, %191 : vector<2x6xf32>
    %cst_83 = arith.constant dense<0xFF800000> : vector<2xf32>
    %193 = vector.multi_reduction <maximumf>, %192, %cst_83 [1] : vector<2x6xf32> to vector<2xf32>
    %194 = vector.shape_cast %193 : vector<2xf32> to vector<2x1xf32>
    %195 = vector.broadcast %194 : vector<2x1xf32> to vector<2x6xf32>
    %196 = arith.subf %192, %195 : vector<2x6xf32>
    %197 = math.exp %196 : vector<2x6xf32>
    %cst_84 = arith.constant dense<0.000000e+00> : vector<2xf32>
    %198 = vector.multi_reduction <add>, %197, %cst_84 [1] : vector<2x6xf32> to vector<2xf32>
    %199 = vector.shape_cast %198 : vector<2xf32> to vector<2x1xf32>
    %200 = tpu.reciprocal %199 {approx = true} : vector<2x1xf32> -> vector<2x1xf32>
    %201 = vector.broadcast %200 : vector<2x1xf32> to vector<2x6xf32>
    %202 = arith.mulf %197, %201 : vector<2x6xf32>
    %c0_85 = arith.constant 0 : index
    %c0_86 = arith.constant 0 : index
    %203 = vector.load %arg20[%c0_85, %c0_86] : memref<2x6xf32, #tpu.memory_space<vmem>>, vector<2x6xf32>
    tpu.vector_store %arg20[%c0_85, %c0_86], %202 {strides = array<i32>} : memref<2x6xf32, #tpu.memory_space<vmem>>, vector<2x6xf32>,
    return
  }
}

</mosaic_0001>

<llo_original>
// kernel: tpu_custom_call.1
$region0: #{tpu_custom_call.1}
  #allocation0 [shape = 'u32[]', space=smem, size = 0x4, offset = 0x4, fixed_abs, tag = 'smem constant byte address 0x4 - core index']
  #allocation1 [shape = 'u32[144,128]{1,0:T(1,128)}', space=vmem, size = 0x12000, scoped, tag = 'internal scratch']
  %s0 = inlined_call_operand.hbm [shape: f32[8,98], index: 0, kind: input, shape index: {}]
  %s1 = inlined_call_operand.hbm [shape: f32[82,98], index: 1, kind: input, shape index: {}]
  %s2 = inlined_call_operand.hbm [shape: f32[2,82], index: 2, kind: input, shape index: {}]
  %s3 = inlined_call_operand.hbm [shape: f32[8,72], index: 3, kind: input, shape index: {}]
  %s4 = inlined_call_operand.vmem [shape: f32[8,1], index: 4, kind: input, shape index: {}]
  %s5 = inlined_call_operand.hbm [shape: f32[8,72], index: 5, kind: input, shape index: {}]
  %s6 = inlined_call_operand.vmem [shape: f32[8,1], index: 6, kind: input, shape index: {}]
  %s7 = inlined_call_operand.hbm [shape: f32[8,72], index: 7, kind: input, shape index: {}]
  %s8 = inlined_call_operand.vmem [shape: f32[8,1], index: 8, kind: input, shape index: {}]
  %s9 = inlined_call_operand.hbm [shape: f32[2,2,32], index: 9, kind: input, shape index: {}]
  %s10 = inlined_call_operand.hbm [shape: f32[8,96], index: 10, kind: input, shape index: {}]
  %s11 = inlined_call_operand.vmem [shape: f32[32,96], index: 11, kind: input, shape index: {}]
  %s12 = inlined_call_operand.vmem [shape: f32[1,96], index: 12, kind: input, shape index: {}]
  %s13 = inlined_call_operand.vmem [shape: f32[1,96], index: 13, kind: input, shape index: {}]
  %s14 = inlined_call_operand.vmem [shape: f32[32,96], index: 14, kind: input, shape index: {}]
  %s15 = inlined_call_operand.vmem [shape: f32[32,96], index: 15, kind: input, shape index: {}]
  %s16 = inlined_call_operand.vmem [shape: f32[1,96], index: 16, kind: input, shape index: {}]
  %s17 = inlined_call_operand.vmem [shape: f32[1,96], index: 17, kind: input, shape index: {}]
  %s18 = inlined_call_operand.vmem [shape: f32[32,6], index: 18, kind: input, shape index: {}]
  %s19 = inlined_call_operand.vmem [shape: f32[1,6], index: 19, kind: input, shape index: {}]
  %s20 = inlined_call_operand.hbm [shape: f32[2,6], index: 20, kind: output, shape index: {0}]
  %s21 = inlined_call_operand.hbm [shape: f32[2,2,32], index: 21, kind: output, shape index: {1}]
  %22 = xla_tuple %s20, %s21
  %s23 = sld [smem:[#allocation0]]
  $region130: #{tpu_custom_call.1} parent=0
    _
  %s25 = ssub.s32 1, %s23
  %s26 = scalar_select 0, %s25, %s23
  $region1: #{tpu_custom_call.1} parent=0
    #allocation2 [shape = 'u8[4096]{0}', space=vmem, size = 0x1000, scoped, tag = 'input window, operand 0, single buffered']
    #allocation3 [shape = 's32[1]{0}', space=sflag, size = 0x4, scoped, tag = 'scoped memory for tpu_custom_call.1']
    #allocation4 [shape = 's32[1]{0}', space=sflag, size = 0x4, scoped, tag = 'scoped memory for tpu_custom_call.1']
    #allocation5 [shape = 'u8[45056]{0}', space=vmem, size = 0xb000, scoped, tag = 'input window, operand 1, single buffered']
    #allocation6 [shape = 's32[1]{0}', space=sflag, size = 0x4, scoped, tag = 'scoped memory for tpu_custom_call.1']
    #allocation7 [shape = 'u8[1024]{0}', space=vmem, size = 0x400, scoped, tag = 'input window, operand 2, single buffered']
    #allocation8 [shape = 'u8[4096]{0}', space=vmem, size = 0x1000, scoped, tag = 'input window, operand 3, single buffered']
    #allocation9 [shape = 's32[1]{0}', space=sflag, size = 0x4, scoped, tag = 'scoped memory for tpu_custom_call.1']
    #allocation10 [shape = 'u8[4096]{0}', space=vmem, size = 0x1000, scoped, tag = 'input window, operand 5, single buffered']
    #allocation11 [shape = 'u8[4096]{0}', space=vmem, size = 0x1000, scoped, tag = 'input window, operand 7, single buffered']
    #allocation12 [shape = 's32[1]{0}', space=sflag, size = 0x4, scoped, tag = 'scoped memory for tpu_custom_call.1']
    #allocation13 [shape = 'u8[2048]{0}', space=vmem, size = 0x800, scoped, tag = 'input window, operand 9, single buffered']
    #allocation14 [shape = 'u8[4096]{0}', space=vmem, size = 0x1000, scoped, tag = 'input window, operand 10, single buffered']
    #allocation15 [shape = 's32[1]{0}', space=sflag, size = 0x4, scoped, tag = 'scoped memory for tpu_custom_call.1']
    #allocation16 [shape = 'u8[1024]{0}', space=vmem, size = 0x400, scoped, tag = 'output window, operand 0, single buffered']
    #allocation17 [shape = 'u8[2048]{0}', space=vmem, size = 0x800, scoped, tag = 'output window, operand 1, single buffered']
    #allocation18 [shape = 's32[1]{0}', space=sflag, size = 0x4, scoped, tag = 'scoped memory for tpu_custom_call.1']
    %27 = vsyncpa [#allocation3], 0
    %28 = vsyncpa [#allocation6], 0
    %29 = vsyncpa [#allocation9], 0
    %30 = vsyncpa [#allocation12], 0
    %31 = vsyncpa [#allocation15], 0
    %32 = vsyncpa [#allocation4], 0
    %33 = vsyncpa [#allocation18], 0
    // Predicated region
    $region2: #{tpu_custom_call.1} parent=1 // pred_check
      _
    $region3: #{tpu_custom_call.1} parent=1 // pred_check_branch
      %35 = sbr.rel (0) target = $region5
    $region4: #{tpu_custom_call.1} parent=1 // pred_region
      %s37 = ssub.s32 128, 128
      %38 = vsyncadd [#allocation3], %s37
      %s40 = sshll.u32 [#allocation2], 4
      %s41 = int_to_ptr.vmem [resolvable:$true] %s40
      %43 = dma.hbm_to_vmem [thread:$0]  %s0, 128, %s41, [#allocation3]
    $region5: #{tpu_custom_call.1} parent=1 // pred_fallthru
      _
    // Predicated region
    $region6: #{tpu_custom_call.1} parent=1 // pred_check
      _
    $region7: #{tpu_custom_call.1} parent=1 // pred_check_branch
      %45 = sbr.rel (0) target = $region9
    $region8: #{tpu_custom_call.1} parent=1 // pred_region
      %s47 = ssub.s32 1408, 1408
      %48 = vsyncadd [#allocation6], %s47
      %s49 = sshll.u32 [#allocation5], 4
      %s50 = int_to_ptr.vmem [resolvable:$true] %s49
      %55 = dma.hbm_to_vmem [thread:$0]  %s1, 1408, %s50, [#allocation6], 128, 128, 8
    $region9: #{tpu_custom_call.1} parent=1 // pred_fallthru
      _
    // Predicated region
    $region10: #{tpu_custom_call.1} parent=1 // pred_check
      _
    $region11: #{tpu_custom_call.1} parent=1 // pred_check_branch
      %57 = sbr.rel (0) target = $region13
    $region12: #{tpu_custom_call.1} parent=1 // pred_region
      %s59 = ssub.s32 32, 32
      %60 = vsyncadd [#allocation6], %s59
      %s62 = sshll.u32 [#allocation7], 4
      %s63 = int_to_ptr.vmem [resolvable:$true] %s62
      %65 = dma.hbm_to_vmem [thread:$0]  %s2, 32, %s63, [#allocation6]
    $region13: #{tpu_custom_call.1} parent=1 // pred_fallthru
      _
    // Predicated region
    $region14: #{tpu_custom_call.1} parent=1 // pred_check
      _
    $region15: #{tpu_custom_call.1} parent=1 // pred_check_branch
      %67 = sbr.rel (0) target = $region17
    $region16: #{tpu_custom_call.1} parent=1 // pred_region
      %s69 = ssub.s32 128, 128
      %70 = vsyncadd [#allocation9], %s69
      %s72 = sshll.u32 [#allocation8], 4
      %s73 = int_to_ptr.vmem [resolvable:$true] %s72
      %75 = dma.hbm_to_vmem [thread:$0]  %s3, 128, %s73, [#allocation9]
    $region17: #{tpu_custom_call.1} parent=1 // pred_fallthru
      _
    // Predicated region
    $region18: #{tpu_custom_call.1} parent=1 // pred_check
      _
    $region19: #{tpu_custom_call.1} parent=1 // pred_check_branch
      %77 = sbr.rel (0) target = $region21
    $region20: #{tpu_custom_call.1} parent=1 // pred_region
      _
    $region21: #{tpu_custom_call.1} parent=1 // pred_fallthru
      _
    // Predicated region
    $region22: #{tpu_custom_call.1} parent=1 // pred_check
      _
    $region23: #{tpu_custom_call.1} parent=1 // pred_check_branch
      %79 = sbr.rel (0) target = $region25
    $region24: #{tpu_custom_call.1} parent=1 // pred_region
      %s81 = ssub.s32 128, 128
      %82 = vsyncadd [#allocation9], %s81
      %s84 = sshll.u32 [#allocation10], 4
      %s85 = int_to_ptr.vmem [resolvable:$true] %s84
      %87 = dma.hbm_to_vmem [thread:$0]  %s5, 128, %s85, [#allocation9]
    $region25: #{tpu_custom_call.1} parent=1 // pred_fallthru
      _
    // Predicated region
    $region26: #{tpu_custom_call.1} parent=1 // pred_check
      _
    $region27: #{tpu_custom_call.1} parent=1 // pred_check_branch
      %89 = sbr.rel (0) target = $region29
    $region28: #{tpu_custom_call.1} parent=1 // pred_region
      _
    $region29: #{tpu_custom_call.1} parent=1 // pred_fallthru
      _
    // Predicated region
    $region30: #{tpu_custom_call.1} parent=1 // pred_check
      _
    $region31: #{tpu_custom_call.1} parent=1 // pred_check_branch
      %91 = sbr.rel (0) target = $region33
    $region32: #{tpu_custom_call.1} parent=1 // pred_region
      %s93 = ssub.s32 128, 128
      %94 = vsyncadd [#allocation12], %s93
      %s96 = sshll.u32 [#allocation11], 4
      %s97 = int_to_ptr.vmem [resolvable:$true] %s96
      %99 = dma.hbm_to_vmem [thread:$0]  %s7, 128, %s97, [#allocation12]
    $region33: #{tpu_custom_call.1} parent=1 // pred_fallthru
      _
    // Predicated region
    $region34: #{tpu_custom_call.1} parent=1 // pred_check
      _
    $region35: #{tpu_custom_call.1} parent=1 // pred_check_branch
      %101 = sbr.rel (0) target = $region37
    $region36: #{tpu_custom_call.1} parent=1 // pred_region
      _
    $region37: #{tpu_custom_call.1} parent=1 // pred_fallthru
      _
    // Predicated region
    $region38: #{tpu_custom_call.1} parent=1 // pred_check
      _
    $region39: #{tpu_custom_call.1} parent=1 // pred_check_branch
      %103 = sbr.rel (0) target = $region41
    $region40: #{tpu_custom_call.1} parent=1 // pred_region
      %s105 = ssub.s32 64, 64
      %106 = vsyncadd [#allocation12], %s105
      %s107 = sshll.u32 [#allocation13], 4
      %s108 = int_to_ptr.vmem [resolvable:$true] %s107
      %113 = dma.hbm_to_vmem [thread:$0]  %s9, 64, %s108, [#allocation12], 32, 32, 2
    $region41: #{tpu_custom_call.1} parent=1 // pred_fallthru
      _
    // Predicated region
    $region42: #{tpu_custom_call.1} parent=1 // pred_check
      _
    $region43: #{tpu_custom_call.1} parent=1 // pred_check_branch
      %115 = sbr.rel (0) target = $region45
    $region44: #{tpu_custom_call.1} parent=1 // pred_region
      %s117 = ssub.s32 128, 128
      %118 = vsyncadd [#allocation15], %s117
      %s120 = sshll.u32 [#allocation14], 4
      %s121 = int_to_ptr.vmem [resolvable:$true] %s120
      %123 = dma.hbm_to_vmem [thread:$0]  %s10, 128, %s121, [#allocation15]
    $region45: #{tpu_custom_call.1} parent=1 // pred_fallthru
      _
    // Predicated region
    $region46: #{tpu_custom_call.1} parent=1 // pred_check
      _
    $region47: #{tpu_custom_call.1} parent=1 // pred_check_branch
      %125 = sbr.rel (0) target = $region49
    $region48: #{tpu_custom_call.1} parent=1 // pred_region
      _
    $region49: #{tpu_custom_call.1} parent=1 // pred_fallthru
      _
    // Predicated region
    $region50: #{tpu_custom_call.1} parent=1 // pred_check
      _
    $region51: #{tpu_custom_call.1} parent=1 // pred_check_branch
      %127 = sbr.rel (0) target = $region53
    $region52: #{tpu_custom_call.1} parent=1 // pred_region
      _
    $region53: #{tpu_custom_call.1} parent=1 // pred_fallthru
      _
    // Predicated region
    $region54: #{tpu_custom_call.1} parent=1 // pred_check
      _
    $region55: #{tpu_custom_call.1} parent=1 // pred_check_branch
      %129 = sbr.rel (0) target = $region57
    $region56: #{tpu_custom_call.1} parent=1 // pred_region
      _
    $region57: #{tpu_custom_call.1} parent=1 // pred_fallthru
      _
    // Predicated region
    $region58: #{tpu_custom_call.1} parent=1 // pred_check
      _
    $region59: #{tpu_custom_call.1} parent=1 // pred_check_branch
      %131 = sbr.rel (0) target = $region61
    $region60: #{tpu_custom_call.1} parent=1 // pred_region
      _
    $region61: #{tpu_custom_call.1} parent=1 // pred_fallthru
      _
    // Predicated region
    $region62: #{tpu_custom_call.1} parent=1 // pred_check
      _
    $region63: #{tpu_custom_call.1} parent=1 // pred_check_branch
      %133 = sbr.rel (0) target = $region65
    $region64: #{tpu_custom_call.1} parent=1 // pred_region
      _
    $region65: #{tpu_custom_call.1} parent=1 // pred_fallthru
      _
    // Predicated region
    $region66: #{tpu_custom_call.1} parent=1 // pred_check
      _
    $region67: #{tpu_custom_call.1} parent=1 // pred_check_branch
      %135 = sbr.rel (0) target = $region69
    $region68: #{tpu_custom_call.1} parent=1 // pred_region
      _
    $region69: #{tpu_custom_call.1} parent=1 // pred_fallthru
      _
    // Predicated region
    $region70: #{tpu_custom_call.1} parent=1 // pred_check
      _
    $region71: #{tpu_custom_call.1} parent=1 // pred_check_branch
      %137 = sbr.rel (0) target = $region73
    $region72: #{tpu_custom_call.1} parent=1 // pred_region
      _
    $region73: #{tpu_custom_call.1} parent=1 // pred_fallthru
      _
    // Predicated region
    $region74: #{tpu_custom_call.1} parent=1 // pred_check
      _
    $region75: #{tpu_custom_call.1} parent=1 // pred_check_branch
      %139 = sbr.rel (0) target = $region77
    $region76: #{tpu_custom_call.1} parent=1 // pred_region
      _
    $region77: #{tpu_custom_call.1} parent=1 // pred_fallthru
      _
    // Predicated region
    $region78: #{tpu_custom_call.1} parent=1 // pred_check
      _
    $region79: #{tpu_custom_call.1} parent=1 // pred_check_branch
      %141 = sbr.rel (0) target = $region81
    $region80: #{tpu_custom_call.1} parent=1 // pred_region
      _
    $region81: #{tpu_custom_call.1} parent=1 // pred_fallthru
      _
    // Predicated region
    $region82: #{tpu_custom_call.1} parent=1 // pred_check
      _
    $region83: #{tpu_custom_call.1} parent=1 // pred_check_branch
      %143 = sbr.rel (0) target = $region85
    $region84: #{tpu_custom_call.1} parent=1 // pred_region
      %144 = dma.done [#allocation3], 128
    $region85: #{tpu_custom_call.1} parent=1 // pred_fallthru
      _
    // Predicated region
    $region86: #{tpu_custom_call.1} parent=1 // pred_check
      _
    $region87: #{tpu_custom_call.1} parent=1 // pred_check_branch
      %146 = sbr.rel (0) target = $region89
    $region88: #{tpu_custom_call.1} parent=1 // pred_region
      %147 = dma.done [#allocation6], 1408
    $region89: #{tpu_custom_call.1} parent=1 // pred_fallthru
      _
    // Predicated region
    $region90: #{tpu_custom_call.1} parent=1 // pred_check
      _
    $region91: #{tpu_custom_call.1} parent=1 // pred_check_branch
      %149 = sbr.rel (0) target = $region93
    $region92: #{tpu_custom_call.1} parent=1 // pred_region
      %150 = dma.done [#allocation6], 32
    $region93: #{tpu_custom_call.1} parent=1 // pred_fallthru
      _
    // Predicated region
    $region94: #{tpu_custom_call.1} parent=1 // pred_check
      _
    $region95: #{tpu_custom_call.1} parent=1 // pred_check_branch
      %152 = sbr.rel (0) target = $region97
    $region96: #{tpu_custom_call.1} parent=1 // pred_region
      %153 = dma.done [#allocation9], 128
    $region97: #{tpu_custom_call.1} parent=1 // pred_fallthru
      _
    // Predicated region
    $region98: #{tpu_custom_call.1} parent=1 // pred_check
      _
    $region99: #{tpu_custom_call.1} parent=1 // pred_check_branch
      %155 = sbr.rel (0) target = $region101
    $region100: #{tpu_custom_call.1} parent=1 // pred_region
      %156 = dma.done [#allocation9], 128
    $region101: #{tpu_custom_call.1} parent=1 // pred_fallthru
      _
    // Predicated region
    $region102: #{tpu_custom_call.1} parent=1 // pred_check
      _
    $region103: #{tpu_custom_call.1} parent=1 // pred_check_branch
      %158 = sbr.rel (0) target = $region105
    $region104: #{tpu_custom_call.1} parent=1 // pred_region
      %159 = dma.done [#allocation12], 128
    $region105: #{tpu_custom_call.1} parent=1 // pred_fallthru
      _
    // Predicated region
    $region106: #{tpu_custom_call.1} parent=1 // pred_check
      _
    $region107: #{tpu_custom_call.1} parent=1 // pred_check_branch
      %161 = sbr.rel (0) target = $region109
    $region108: #{tpu_custom_call.1} parent=1 // pred_region
      %162 = dma.done [#allocation12], 64
    $region109: #{tpu_custom_call.1} parent=1 // pred_fallthru
      _
    // Predicated region
    $region110: #{tpu_custom_call.1} parent=1 // pred_check
      _
    $region111: #{tpu_custom_call.1} parent=1 // pred_check_branch
      %164 = sbr.rel (0) target = $region113
    $region112: #{tpu_custom_call.1} parent=1 // pred_region
      %165 = dma.done [#allocation15], 128
    $region113: #{tpu_custom_call.1} parent=1 // pred_fallthru
      _
    %v166 = vld [vmem:[#allocation5] sm:$0xff]
    %v167 = vld [vmem:[#allocation5 + $0x8] sm:$0xff]
    %v168 = vld [vmem:[#allocation5 + $0x10] sm:$0xff]
    %v169 = vld [vmem:[#allocation5 + $0x18] sm:$0xff]
    %v170 = vld [vmem:[#allocation5 + $0x20] sm:$0xff]
    %v171 = vld [vmem:[#allocation5 + $0x28] sm:$0xff]
    %v172 = vld [vmem:[#allocation5 + $0x30] sm:$0xff]
    %v173 = vld [vmem:[#allocation5 + $0x38] sm:$0xff]
    %v174 = vld [vmem:[#allocation5 + $0x40] sm:$0xff]
    %v175 = vld [vmem:[#allocation5 + $0x48] sm:$0xff]
    %v176 = vld [vmem:[#allocation5 + $0x50] sm:$0x3]
    %v177 = vld [vmem:[#allocation2] sm:$0xff]
    %179 = vrot.lane.b32.xlu0 %v177, 127
    %v180 = vpop.permute.xlu0 %179
    %182 = vrot.lane.b32.xlu0 %v177, 126
    %v183 = vpop.permute.xlu0 %182
    %185 = vrot.lane.b32.xlu0 %v177, 121
    %v186 = vpop.permute.xlu0 %185
    %188 = vrot.lane.b32.xlu0 %v177, 120
    %v189 = vpop.permute.xlu0 %188
    %191 = vrot.lane.b32.xlu0 %v177, 119
    %v192 = vpop.permute.xlu0 %191
    %194 = vrot.lane.b32.xlu0 %v177, 114
    %v195 = vpop.permute.xlu0 %194
    %197 = vrot.lane.b32.xlu0 %v177, 113
    %v198 = vpop.permute.xlu0 %197
    %200 = vrot.lane.b32.xlu0 %v177, 112
    %v201 = vpop.permute.xlu0 %200
    %v203 = vld [vmem:[#allocation8] sm:$0xff]
    %v204 = vld [vmem:[%s4] sm:$0xff]
    %206 = vset.pattern.permute.xlu0 0
    %207 = vperm.xlu0 %206, %v204
    %v208 = vpop.permute.xlu0 %207
    %vm210 = vcmask 588800
    %v212 = vsel %vm210, %v203, 0
    %214 = vmatprep.subr.mxu0 0.0
    %215 = vmatpush1.msra.mxu0 %v177
    %216 = vmatprep.subr.mxu0 0.0
    %217 = vmatpush1.msra.mxu0 %v180
    %218 = vmatprep.subr.mxu0 0.0
    %219 = vmatpush1.msra.mxu0 %v183
    %220 = vmatprep.subr.mxu0 0.0
    %221 = vmatpush1.msra.mxu0 %v186
    %222 = vmatprep.subr.mxu0 0.0
    %223 = vmatpush1.msra.mxu0 %v189
    %224 = vmatprep.subr.mxu0 0.0
    %225 = vmatpush1.msra.mxu0 %v192
    %226 = vmatprep.subr.mxu0 0.0
    %227 = vmatpush1.msra.mxu0 %v195
    %228 = vmatprep.subr.mxu0 0.0
    %229 = vmatpush1.msra.mxu0 %v198
    %230 = vmatprep.subr.mxu0 0.0
    %231 = vmatpush1.msra.mxu0 %v201
    %232 = vmatprep.subr.mxu0 0.0
    %233 = vmatpush1.msra.mxu0 0.0
    %234 = vmatprep.subr.mxu0 0.0
    %235 = vmatpush1.msra.mxu0 0.0
    %236 = vmatprep.subr.mxu0 0.0
    %237 = vmatpush1.msra.mxu0 0.0
    %238 = vmatprep.subr.mxu0 0.0
    %239 = vmatpush1.msra.mxu0 0.0
    %240 = vmatprep.subr.mxu0 0.0
    %241 = vmatpush1.msra.mxu0 0.0
    %242 = vmatprep.subr.mxu0 0.0
    %243 = vmatpush1.msra.mxu0 0.0
    %244 = vmatprep.subr.mxu0 0.0
    %245 = vmatpush1.msra.mxu0 0.0
    %246 = vmatprep.subr.mxu0 0.0
    %247 = vmatpush1.msra.mxu0 0.0
    %248 = vmatprep.subr.mxu0 0.0
    %249 = vmatpush1.msra.mxu0 0.0
    %250 = vmatprep.subr.mxu0 0.0
    %251 = vmatpush1.msra.mxu0 0.0
    %252 = vmatprep.subr.mxu0 0.0
    %253 = vmatpush1.msra.mxu0 0.0
    %254 = vmatprep.subr.mxu0 0.0
    %255 = vmatpush1.msra.mxu0 0.0
    %256 = vmatprep.subr.mxu0 0.0
    %257 = vmatpush1.msra.mxu0 0.0
    %258 = vmatprep.subr.mxu0 0.0
    %259 = vmatpush1.msra.mxu0 0.0
    %260 = vmatprep.subr.mxu0 0.0
    %261 = vmatpush1.msra.mxu0 0.0
    %262 = vmatprep.subr.mxu0 0.0
    %263 = vmatpush1.msra.mxu0 0.0
    %264 = vmatprep.subr.mxu0 0.0
    %265 = vmatpush1.msra.mxu0 0.0
    %266 = vmatprep.subr.mxu0 0.0
    %267 = vmatpush1.msra.mxu0 0.0
    %268 = vmatprep.subr.mxu0 0.0
    %269 = vmatpush1.msra.mxu0 0.0
    %270 = vmatprep.subr.mxu0 0.0
    %271 = vmatpush1.msra.mxu0 0.0
    %272 = vmatprep.subr.mxu0 0.0
    %273 = vmatpush1.msra.mxu0 0.0
    %274 = vmatprep.subr.mxu0 0.0
    %275 = vmatpush1.msra.mxu0 0.0
    %276 = vmatprep.subr.mxu0 0.0
    %277 = vmatpush1.msra.mxu0 0.0
    %278 = vmatprep.mubr.f32.mxu0 0.0
    %279 = vmatmul.mubr.f32.gmra.mrb[0].mxu0 %v212
    %v280 = vpop.f32.mrb[0].mxu0
    %v281 = vadd.f32 %v208, %v280
    %v282 = vpop.f32.mrb[0].mxu0
    %283 = vdwg.mxu0
    %v284 = vmax.f32 %v281, 0.0
    %vm285 = vcmask 670720
    %v287 = vsel %vm285, %v284, 0
    %vm289 = vcmask 1041408
    %v291 = vsel %vm289, %v176, 0
    %293 = vmatprep.subr.mxu0 0.0
    %294 = vmatpush1.msra.mxu0 %v166
    %295 = vmatprep.subr.mxu0 0.0
    %296 = vmatpush1.msra.mxu0 %v167
    %297 = vmatprep.subr.mxu0 0.0
    %298 = vmatpush1.msra.mxu0 %v168
    %299 = vmatprep.subr.mxu0 0.0
    %300 = vmatpush1.msra.mxu0 %v169
    %301 = vmatprep.subr.mxu0 0.0
    %302 = vmatpush1.msra.mxu0 %v170
    %303 = vmatprep.subr.mxu0 0.0
    %304 = vmatpush1.msra.mxu0 %v171
    %305 = vmatprep.subr.mxu0 0.0
    %306 = vmatpush1.msra.mxu0 %v172
    %307 = vmatprep.subr.mxu0 0.0
    %308 = vmatpush1.msra.mxu0 %v173
    %309 = vmatprep.subr.mxu0 0.0
    %310 = vmatpush1.msra.mxu0 %v174
    %311 = vmatprep.subr.mxu0 0.0
    %312 = vmatpush1.msra.mxu0 %v175
    %313 = vmatprep.subr.mxu0 0.0
    %314 = vmatpush1.msra.mxu0 %v291
    %315 = vmatprep.subr.mxu0 0.0
    %316 = vmatpush1.msra.mxu0 0.0
    %317 = vmatprep.subr.mxu0 0.0
    %318 = vmatpush1.msra.mxu0 0.0
    %319 = vmatprep.subr.mxu0 0.0
    %320 = vmatpush1.msra.mxu0 0.0
    %321 = vmatprep.subr.mxu0 0.0
    %322 = vmatpush1.msra.mxu0 0.0
    %323 = vmatprep.subr.mxu0 0.0
    %324 = vmatpush1.msra.mxu0 0.0
    %325 = vmatprep.subr.mxu0 0.0
    %326 = vmatpush1.msra.mxu0 0.0
    %327 = vmatprep.subr.mxu0 0.0
    %328 = vmatpush1.msra.mxu0 0.0
    %329 = vmatprep.subr.mxu0 0.0
    %330 = vmatpush1.msra.mxu0 0.0
    %331 = vmatprep.subr.mxu0 0.0
    %332 = vmatpush1.msra.mxu0 0.0
    %333 = vmatprep.subr.mxu0 0.0
    %334 = vmatpush1.msra.mxu0 0.0
    %335 = vmatprep.subr.mxu0 0.0
    %336 = vmatpush1.msra.mxu0 0.0
    %337 = vmatprep.subr.mxu0 0.0
    %338 = vmatpush1.msra.mxu0 0.0
    %339 = vmatprep.subr.mxu0 0.0
    %340 = vmatpush1.msra.mxu0 0.0
    %341 = vmatprep.subr.mxu0 0.0
    %342 = vmatpush1.msra.mxu0 0.0
    %343 = vmatprep.subr.mxu0 0.0
    %344 = vmatpush1.msra.mxu0 0.0
    %345 = vmatprep.subr.mxu0 0.0
    %346 = vmatpush1.msra.mxu0 0.0
    %347 = vmatprep.subr.mxu0 0.0
    %348 = vmatpush1.msra.mxu0 0.0
    %349 = vmatprep.subr.mxu0 0.0
    %350 = vmatpush1.msra.mxu0 0.0
    %351 = vmatprep.subr.mxu0 0.0
    %352 = vmatpush1.msra.mxu0 0.0
    %353 = vmatprep.subr.mxu0 0.0
    %354 = vmatpush1.msra.mxu0 0.0
    %355 = vmatprep.subr.mxu0 0.0
    %356 = vmatpush1.msra.mxu0 0.0
    %357 = vmatprep.mubr.f32.mxu0 0.0
    %358 = vmatmul.mubr.f32.gmra.mrb[0].mxu0 %v287
    %v359 = vpop.f32.mrb[0].mxu0
    %v360 = vadd.f32 0.0, %v359
    %v361 = vpop.f32.mrb[0].mxu0
    %362 = vdwg.mxu0
    %364 = vrot.lane.b32.xlu0 %v360, 127
    %v365 = vpop.permute.xlu0 %364
    %367 = vrot.lane.b32.xlu0 %v360, 126
    %v368 = vpop.permute.xlu0 %367
    %370 = vrot.lane.b32.xlu0 %v360, 121
    %v371 = vpop.permute.xlu0 %370
    %373 = vrot.lane.b32.xlu0 %v360, 120
    %v374 = vpop.permute.xlu0 %373
    %376 = vrot.lane.b32.xlu0 %v360, 119
    %v377 = vpop.permute.xlu0 %376
    %379 = vrot.lane.b32.xlu0 %v360, 114
    %v380 = vpop.permute.xlu0 %379
    %382 = vrot.lane.b32.xlu0 %v360, 113
    %v383 = vpop.permute.xlu0 %382
    %385 = vrot.lane.b32.xlu0 %v360, 112
    %v386 = vpop.permute.xlu0 %385
    %v388 = vld [vmem:[#allocation10] sm:$0xff]
    %v389 = vld [vmem:[%s6] sm:$0xff]
    %391 = vset.pattern.permute.xlu0 0
    %392 = vperm.xlu0 %391, %v389
    %v393 = vpop.permute.xlu0 %392
    %v396 = vsel %vm210, %v388, 0
    %398 = vmatprep.subr.mxu0 0.0
    %399 = vmatpush1.msra.mxu0 %v360
    %400 = vmatprep.subr.mxu0 0.0
    %401 = vmatpush1.msra.mxu0 %v365
    %402 = vmatprep.subr.mxu0 0.0
    %403 = vmatpush1.msra.mxu0 %v368
    %404 = vmatprep.subr.mxu0 0.0
    %405 = vmatpush1.msra.mxu0 %v371
    %406 = vmatprep.subr.mxu0 0.0
    %407 = vmatpush1.msra.mxu0 %v374
    %408 = vmatprep.subr.mxu0 0.0
    %409 = vmatpush1.msra.mxu0 %v377
    %410 = vmatprep.subr.mxu0 0.0
    %411 = vmatpush1.msra.mxu0 %v380
    %412 = vmatprep.subr.mxu0 0.0
    %413 = vmatpush1.msra.mxu0 %v383
    %414 = vmatprep.subr.mxu0 0.0
    %415 = vmatpush1.msra.mxu0 %v386
    %416 = vmatprep.subr.mxu0 0.0
    %417 = vmatpush1.msra.mxu0 0.0
    %418 = vmatprep.subr.mxu0 0.0
    %419 = vmatpush1.msra.mxu0 0.0
    %420 = vmatprep.subr.mxu0 0.0
    %421 = vmatpush1.msra.mxu0 0.0
    %422 = vmatprep.subr.mxu0 0.0
    %423 = vmatpush1.msra.mxu0 0.0
    %424 = vmatprep.subr.mxu0 0.0
    %425 = vmatpush1.msra.mxu0 0.0
    %426 = vmatprep.subr.mxu0 0.0
    %427 = vmatpush1.msra.mxu0 0.0
    %428 = vmatprep.subr.mxu0 0.0
    %429 = vmatpush1.msra.mxu0 0.0
    %430 = vmatprep.subr.mxu0 0.0
    %431 = vmatpush1.msra.mxu0 0.0
    %432 = vmatprep.subr.mxu0 0.0
    %433 = vmatpush1.msra.mxu0 0.0
    %434 = vmatprep.subr.mxu0 0.0
    %435 = vmatpush1.msra.mxu0 0.0
    %436 = vmatprep.subr.mxu0 0.0
    %437 = vmatpush1.msra.mxu0 0.0
    %438 = vmatprep.subr.mxu0 0.0
    %439 = vmatpush1.msra.mxu0 0.0
    %440 = vmatprep.subr.mxu0 0.0
    %441 = vmatpush1.msra.mxu0 0.0
    %442 = vmatprep.subr.mxu0 0.0
    %443 = vmatpush1.msra.mxu0 0.0
    %444 = vmatprep.subr.mxu0 0.0
    %445 = vmatpush1.msra.mxu0 0.0
    %446 = vmatprep.subr.mxu0 0.0
    %447 = vmatpush1.msra.mxu0 0.0
    %448 = vmatprep.subr.mxu0 0.0
    %449 = vmatpush1.msra.mxu0 0.0
    %450 = vmatprep.subr.mxu0 0.0
    %451 = vmatpush1.msra.mxu0 0.0
    %452 = vmatprep.subr.mxu0 0.0
    %453 = vmatpush1.msra.mxu0 0.0
    %454 = vmatprep.subr.mxu0 0.0
    %455 = vmatpush1.msra.mxu0 0.0
    %456 = vmatprep.subr.mxu0 0.0
    %457 = vmatpush1.msra.mxu0 0.0
    %458 = vmatprep.subr.mxu0 0.0
    %459 = vmatpush1.msra.mxu0 0.0
    %460 = vmatprep.subr.mxu0 0.0
    %461 = vmatpush1.msra.mxu0 0.0
    %462 = vmatprep.mubr.f32.mxu0 0.0
    %463 = vmatmul.mubr.f32.gmra.mrb[0].mxu0 %v396
    %v464 = vpop.f32.mrb[0].mxu0
    %v465 = vadd.f32 %v393, %v464
    %v466 = vpop.f32.mrb[0].mxu0
    %467 = vdwg.mxu0
    %v468 = vmax.f32 %v465, 0.0
    %v470 = vsel %vm285, %v468, 0
    %472 = vmatprep.subr.mxu0 0.0
    %473 = vmatpush1.msra.mxu0 %v166
    %474 = vmatprep.subr.mxu0 0.0
    %475 = vmatpush1.msra.mxu0 %v167
    %476 = vmatprep.subr.mxu0 0.0
    %477 = vmatpush1.msra.mxu0 %v168
    %478 = vmatprep.subr.mxu0 0.0
    %479 = vmatpush1.msra.mxu0 %v169
    %480 = vmatprep.subr.mxu0 0.0
    %481 = vmatpush1.msra.mxu0 %v170
    %482 = vmatprep.subr.mxu0 0.0
    %483 = vmatpush1.msra.mxu0 %v171
    %484 = vmatprep.subr.mxu0 0.0
    %485 = vmatpush1.msra.mxu0 %v172
    %486 = vmatprep.subr.mxu0 0.0
    %487 = vmatpush1.msra.mxu0 %v173
    %488 = vmatprep.subr.mxu0 0.0
    %489 = vmatpush1.msra.mxu0 %v174
    %490 = vmatprep.subr.mxu0 0.0
    %491 = vmatpush1.msra.mxu0 %v175
    %492 = vmatprep.subr.mxu0 0.0
    %493 = vmatpush1.msra.mxu0 %v291
    %494 = vmatprep.subr.mxu0 0.0
    %495 = vmatpush1.msra.mxu0 0.0
    %496 = vmatprep.subr.mxu0 0.0
    %497 = vmatpush1.msra.mxu0 0.0
    %498 = vmatprep.subr.mxu0 0.0
    %499 = vmatpush1.msra.mxu0 0.0
    %500 = vmatprep.subr.mxu0 0.0
    %501 = vmatpush1.msra.mxu0 0.0
    %502 = vmatprep.subr.mxu0 0.0
    %503 = vmatpush1.msra.mxu0 0.0
    %504 = vmatprep.subr.mxu0 0.0
    %505 = vmatpush1.msra.mxu0 0.0
    %506 = vmatprep.subr.mxu0 0.0
    %507 = vmatpush1.msra.mxu0 0.0
    %508 = vmatprep.subr.mxu0 0.0
    %509 = vmatpush1.msra.mxu0 0.0
    %510 = vmatprep.subr.mxu0 0.0
    %511 = vmatpush1.msra.mxu0 0.0
    %512 = vmatprep.subr.mxu0 0.0
    %513 = vmatpush1.msra.mxu0 0.0
    %514 = vmatprep.subr.mxu0 0.0
    %515 = vmatpush1.msra.mxu0 0.0
    %516 = vmatprep.subr.mxu0 0.0
    %517 = vmatpush1.msra.mxu0 0.0
    %518 = vmatprep.subr.mxu0 0.0
    %519 = vmatpush1.msra.mxu0 0.0
    %520 = vmatprep.subr.mxu0 0.0
    %521 = vmatpush1.msra.mxu0 0.0
    %522 = vmatprep.subr.mxu0 0.0
    %523 = vmatpush1.msra.mxu0 0.0
    %524 = vmatprep.subr.mxu0 0.0
    %525 = vmatpush1.msra.mxu0 0.0
    %526 = vmatprep.subr.mxu0 0.0
    %527 = vmatpush1.msra.mxu0 0.0
    %528 = vmatprep.subr.mxu0 0.0
    %529 = vmatpush1.msra.mxu0 0.0
    %530 = vmatprep.subr.mxu0 0.0
    %531 = vmatpush1.msra.mxu0 0.0
    %532 = vmatprep.subr.mxu0 0.0
    %533 = vmatpush1.msra.mxu0 0.0
    %534 = vmatprep.subr.mxu0 0.0
    %535 = vmatpush1.msra.mxu0 0.0
    %536 = vmatprep.mubr.f32.mxu0 0.0
    %537 = vmatmul.mubr.f32.gmra.mrb[0].mxu0 %v470
    %v538 = vpop.f32.mrb[0].mxu0
    %v539 = vadd.f32 0.0, %v538
    %v540 = vpop.f32.mrb[0].mxu0
    %541 = vdwg.mxu0
    %543 = vrot.lane.b32.xlu0 %v539, 127
    %v544 = vpop.permute.xlu0 %543
    %546 = vrot.lane.b32.xlu0 %v539, 126
    %v547 = vpop.permute.xlu0 %546
    %549 = vrot.lane.b32.xlu0 %v539, 121
    %v550 = vpop.permute.xlu0 %549
    %552 = vrot.lane.b32.xlu0 %v539, 120
    %v553 = vpop.permute.xlu0 %552
    %555 = vrot.lane.b32.xlu0 %v539, 119
    %v556 = vpop.permute.xlu0 %555
    %558 = vrot.lane.b32.xlu0 %v539, 114
    %v559 = vpop.permute.xlu0 %558
    %561 = vrot.lane.b32.xlu0 %v539, 113
    %v562 = vpop.permute.xlu0 %561
    %564 = vrot.lane.b32.xlu0 %v539, 112
    %v565 = vpop.permute.xlu0 %564
    %v567 = vld [vmem:[#allocation11] sm:$0xff]
    %v568 = vld [vmem:[%s8] sm:$0xff]
    %570 = vset.pattern.permute.xlu0 0
    %571 = vperm.xlu0 %570, %v568
    %v572 = vpop.permute.xlu0 %571
    %v575 = vsel %vm210, %v567, 0
    %577 = vmatprep.subr.mxu0 0.0
    %578 = vmatpush1.msra.mxu0 %v539
    %579 = vmatprep.subr.mxu0 0.0
    %580 = vmatpush1.msra.mxu0 %v544
    %581 = vmatprep.subr.mxu0 0.0
    %582 = vmatpush1.msra.mxu0 %v547
    %583 = vmatprep.subr.mxu0 0.0
    %584 = vmatpush1.msra.mxu0 %v550
    %585 = vmatprep.subr.mxu0 0.0
    %586 = vmatpush1.msra.mxu0 %v553
    %587 = vmatprep.subr.mxu0 0.0
    %588 = vmatpush1.msra.mxu0 %v556
    %589 = vmatprep.subr.mxu0 0.0
    %590 = vmatpush1.msra.mxu0 %v559
    %591 = vmatprep.subr.mxu0 0.0
    %592 = vmatpush1.msra.mxu0 %v562
    %593 = vmatprep.subr.mxu0 0.0
    %594 = vmatpush1.msra.mxu0 %v565
    %595 = vmatprep.subr.mxu0 0.0
    %596 = vmatpush1.msra.mxu0 0.0
    %597 = vmatprep.subr.mxu0 0.0
    %598 = vmatpush1.msra.mxu0 0.0
    %599 = vmatprep.subr.mxu0 0.0
    %600 = vmatpush1.msra.mxu0 0.0
    %601 = vmatprep.subr.mxu0 0.0
    %602 = vmatpush1.msra.mxu0 0.0
    %603 = vmatprep.subr.mxu0 0.0
    %604 = vmatpush1.msra.mxu0 0.0
    %605 = vmatprep.subr.mxu0 0.0
    %606 = vmatpush1.msra.mxu0 0.0
    %607 = vmatprep.subr.mxu0 0.0
    %608 = vmatpush1.msra.mxu0 0.0
    %609 = vmatprep.subr.mxu0 0.0
    %610 = vmatpush1.msra.mxu0 0.0
    %611 = vmatprep.subr.mxu0 0.0
    %612 = vmatpush1.msra.mxu0 0.0
    %613 = vmatprep.subr.mxu0 0.0
    %614 = vmatpush1.msra.mxu0 0.0
    %615 = vmatprep.subr.mxu0 0.0
    %616 = vmatpush1.msra.mxu0 0.0
    %617 = vmatprep.subr.mxu0 0.0
    %618 = vmatpush1.msra.mxu0 0.0
    %619 = vmatprep.subr.mxu0 0.0
    %620 = vmatpush1.msra.mxu0 0.0
    %621 = vmatprep.subr.mxu0 0.0
    %622 = vmatpush1.msra.mxu0 0.0
    %623 = vmatprep.subr.mxu0 0.0
    %624 = vmatpush1.msra.mxu0 0.0
    %625 = vmatprep.subr.mxu0 0.0
    %626 = vmatpush1.msra.mxu0 0.0
    %627 = vmatprep.subr.mxu0 0.0
    %628 = vmatpush1.msra.mxu0 0.0
    %629 = vmatprep.subr.mxu0 0.0
    %630 = vmatpush1.msra.mxu0 0.0
    %631 = vmatprep.subr.mxu0 0.0
    %632 = vmatpush1.msra.mxu0 0.0
    %633 = vmatprep.subr.mxu0 0.0
    %634 = vmatpush1.msra.mxu0 0.0
    %635 = vmatprep.subr.mxu0 0.0
    %636 = vmatpush1.msra.mxu0 0.0
    %637 = vmatprep.subr.mxu0 0.0
    %638 = vmatpush1.msra.mxu0 0.0
    %639 = vmatprep.subr.mxu0 0.0
    %640 = vmatpush1.msra.mxu0 0.0
    %641 = vmatprep.mubr.f32.mxu0 0.0
    %642 = vmatmul.mubr.f32.gmra.mrb[0].mxu0 %v575
    %v643 = vpop.f32.mrb[0].mxu0
    %v644 = vadd.f32 %v572, %v643
    %v645 = vpop.f32.mrb[0].mxu0
    %646 = vdwg.mxu0
    %v647 = vmax.f32 %v644, 0.0
    %v648 = vlaneseq
    %v649 = vshrl.u32 %v648, 7
    %v650 = vlaneseq
    %v651 = vand.u32 %v650, 127
    %vm652 = vcmp.eq.s32.totalorder %v649, %v651
    %v653 = vsel %vm652, 1, 0
    %v654 = vcvt.s32.f32 %v653
    %v655 = vld [vmem:[#allocation7] sm:$0x1]
    %v656 = vlaneseq
    %v657 = vshrl.u32 %v656, 7
    %v658 = vsub.s32 0, %v657
    %v659 = vrot.slane %v655, %v658
    %v660 = vmul.f32 %v647, %v659
    %v661 = vsel %vm285, %v660, -inf
    %662 = vmax.xlane.f32.xlu0 %v661
    %v663 = vpop.xlane.xlu0 %662
    %v664 = vmul.f32 %v654, %v663
    %vm665 = vcmask 64512
    %v666 = vsel %vm665, %v664, 0.0
    %v667 = vrot.slane %v666, 4
    %v668 = vadd.f32 %v666, %v667
    %v669 = vrot.slane %v668, 2
    %v670 = vadd.f32 %v668, %v669
    %v671 = vrot.slane %v670, 1
    %v672 = vadd.f32 %v670, %v671
    %vm673 = vcmp.eq.s32.totalorder %v649, 0
    %v674 = vsel %vm673, 1, 0
    %vm675 = vcmp.eq.s32.totalorder %v674, 1
    %v676 = vsel %vm675, %v672, 0.0
    %v677 = vadd.f32 %v676, 0.0
    %v678 = vld [vmem:[#allocation7 + $0x1] sm:$0x1]
    %v679 = vlaneseq
    %v680 = vshrl.u32 %v679, 7
    %v681 = vsub.s32 0, %v680
    %v682 = vrot.slane %v678, %v681
    %v683 = vmul.f32 %v647, %v682
    %v684 = vsel %vm285, %v683, -inf
    %685 = vmax.xlane.f32.xlu0 %v684
    %v686 = vpop.xlane.xlu0 %685
    %v687 = vmul.f32 %v654, %v686
    %v688 = vsel %vm665, %v687, 0.0
    %v689 = vrot.slane %v688, 4
    %v690 = vadd.f32 %v688, %v689
    %v691 = vrot.slane %v690, 2
    %v692 = vadd.f32 %v690, %v691
    %v693 = vrot.slane %v692, 1
    %v694 = vadd.f32 %v692, %v693
    %vm695 = vcmp.eq.s32.totalorder %v649, 1
    %v696 = vsel %vm695, 1, 0
    %vm697 = vcmp.eq.s32.totalorder %v696, 1
    %v698 = vsel %vm697, %v694, 0.0
    %v699 = vadd.f32 %v677, %v698
    %v700 = vld [vmem:[#allocation13] sm:$0x3]
    %v701 = vld [vmem:[#allocation14] sm:$0xff]
    %v702 = vld [vmem:[%s12] sm:$0x1]
    %v704 = vlaneseq
    %v705 = vshrl.u32 %v704, 7
    %v706 = vsub.s32 0, %v705
    %v707 = vrot.slane %v702, %v706
    %v710 = vsel %vm665, %v699, 0
    %712 = vmatprep.subr.mxu0 0.0
    %713 = vmatpush1.msra.mxu0 %v701
    %714 = vmatprep.subr.mxu0 0.0
    %715 = vmatpush1.msra.mxu0 0.0
    %716 = vmatprep.subr.mxu0 0.0
    %717 = vmatpush1.msra.mxu0 0.0
    %718 = vmatprep.subr.mxu0 0.0
    %719 = vmatpush1.msra.mxu0 0.0
    %720 = vmatprep.subr.mxu0 0.0
    %721 = vmatpush1.msra.mxu0 0.0
    %722 = vmatprep.subr.mxu0 0.0
    %723 = vmatpush1.msra.mxu0 0.0
    %724 = vmatprep.subr.mxu0 0.0
    %725 = vmatpush1.msra.mxu0 0.0
    %726 = vmatprep.subr.mxu0 0.0
    %727 = vmatpush1.msra.mxu0 0.0
    %728 = vmatprep.subr.mxu0 0.0
    %729 = vmatpush1.msra.mxu0 0.0
    %730 = vmatprep.subr.mxu0 0.0
    %731 = vmatpush1.msra.mxu0 0.0
    %732 = vmatprep.subr.mxu0 0.0
    %733 = vmatpush1.msra.mxu0 0.0
    %734 = vmatprep.subr.mxu0 0.0
    %735 = vmatpush1.msra.mxu0 0.0
    %736 = vmatprep.subr.mxu0 0.0
    %737 = vmatpush1.msra.mxu0 0.0
    %738 = vmatprep.subr.mxu0 0.0
    %739 = vmatpush1.msra.mxu0 0.0
    %740 = vmatprep.subr.mxu0 0.0
    %741 = vmatpush1.msra.mxu0 0.0
    %742 = vmatprep.subr.mxu0 0.0
    %743 = vmatpush1.msra.mxu0 0.0
    %744 = vmatprep.subr.mxu0 0.0
    %745 = vmatpush1.msra.mxu0 0.0
    %746 = vmatprep.subr.mxu0 0.0
    %747 = vmatpush1.msra.mxu0 0.0
    %748 = vmatprep.subr.mxu0 0.0
    %749 = vmatpush1.msra.mxu0 0.0
    %750 = vmatprep.subr.mxu0 0.0
    %751 = vmatpush1.msra.mxu0 0.0
    %752 = vmatprep.subr.mxu0 0.0
    %753 = vmatpush1.msra.mxu0 0.0
    %754 = vmatprep.subr.mxu0 0.0
    %755 = vmatpush1.msra.mxu0 0.0
    %756 = vmatprep.subr.mxu0 0.0
    %757 = vmatpush1.msra.mxu0 0.0
    %758 = vmatprep.subr.mxu0 0.0
    %759 = vmatpush1.msra.mxu0 0.0
    %760 = vmatprep.subr.mxu0 0.0
    %761 = vmatpush1.msra.mxu0 0.0
    %762 = vmatprep.subr.mxu0 0.0
    %763 = vmatpush1.msra.mxu0 0.0
    %764 = vmatprep.subr.mxu0 0.0
    %765 = vmatpush1.msra.mxu0 0.0
    %766 = vmatprep.subr.mxu0 0.0
    %767 = vmatpush1.msra.mxu0 0.0
    %768 = vmatprep.subr.mxu0 0.0
    %769 = vmatpush1.msra.mxu0 0.0
    %770 = vmatprep.subr.mxu0 0.0
    %771 = vmatpush1.msra.mxu0 0.0
    %772 = vmatprep.subr.mxu0 0.0
    %773 = vmatpush1.msra.mxu0 0.0
    %774 = vmatprep.subr.mxu0 0.0
    %775 = vmatpush1.msra.mxu0 0.0
    %776 = vmatprep.mubr.f32.mxu0 0.0
    %777 = vmatmul.mubr.f32.gmra.mrb[0].mxu0 %v710
    %v778 = vpop.f32.mrb[0].mxu0
    %v779 = vadd.f32 %v707, %v778
    %v780 = vpop.f32.mrb[0].mxu0
    %781 = vdwg.mxu0
    %v782 = vld [vmem:[%s11] sm:$0xff]
    %v783 = vld [vmem:[%s11 + $0x8] sm:$0xff]
    %v784 = vld [vmem:[%s11 + $0x10] sm:$0xff]
    %v785 = vld [vmem:[%s11 + $0x18] sm:$0xff]
    %v786 = vld [vmem:[%s13] sm:$0x1]
    %v788 = vlaneseq
    %v789 = vshrl.u32 %v788, 7
    %v790 = vsub.s32 0, %v789
    %v791 = vrot.slane %v786, %v790
    %vm793 = vcmask 261120
    %v795 = vsel %vm793, %v700, 0
    %797 = vmatprep.subr.mxu0 0.0
    %798 = vmatpush1.msra.mxu0 %v782
    %799 = vmatprep.subr.mxu0 0.0
    %800 = vmatpush1.msra.mxu0 %v783
    %801 = vmatprep.subr.mxu0 0.0
    %802 = vmatpush1.msra.mxu0 %v784
    %803 = vmatprep.subr.mxu0 0.0
    %804 = vmatpush1.msra.mxu0 %v785
    %805 = vmatprep.subr.mxu0 0.0
    %806 = vmatpush1.msra.mxu0 0.0
    %807 = vmatprep.subr.mxu0 0.0
    %808 = vmatpush1.msra.mxu0 0.0
    %809 = vmatprep.subr.mxu0 0.0
    %810 = vmatpush1.msra.mxu0 0.0
    %811 = vmatprep.subr.mxu0 0.0
    %812 = vmatpush1.msra.mxu0 0.0
    %813 = vmatprep.subr.mxu0 0.0
    %814 = vmatpush1.msra.mxu0 0.0
    %815 = vmatprep.subr.mxu0 0.0
    %816 = vmatpush1.msra.mxu0 0.0
    %817 = vmatprep.subr.mxu0 0.0
    %818 = vmatpush1.msra.mxu0 0.0
    %819 = vmatprep.subr.mxu0 0.0
    %820 = vmatpush1.msra.mxu0 0.0
    %821 = vmatprep.subr.mxu0 0.0
    %822 = vmatpush1.msra.mxu0 0.0
    %823 = vmatprep.subr.mxu0 0.0
    %824 = vmatpush1.msra.mxu0 0.0
    %825 = vmatprep.subr.mxu0 0.0
    %826 = vmatpush1.msra.mxu0 0.0
    %827 = vmatprep.subr.mxu0 0.0
    %828 = vmatpush1.msra.mxu0 0.0
    %829 = vmatprep.subr.mxu0 0.0
    %830 = vmatpush1.msra.mxu0 0.0
    %831 = vmatprep.subr.mxu0 0.0
    %832 = vmatpush1.msra.mxu0 0.0
    %833 = vmatprep.subr.mxu0 0.0
    %834 = vmatpush1.msra.mxu0 0.0
    %835 = vmatprep.subr.mxu0 0.0
    %836 = vmatpush1.msra.mxu0 0.0
    %837 = vmatprep.subr.mxu0 0.0
    %838 = vmatpush1.msra.mxu0 0.0
    %839 = vmatprep.subr.mxu0 0.0
    %840 = vmatpush1.msra.mxu0 0.0
    %841 = vmatprep.subr.mxu0 0.0
    %842 = vmatpush1.msra.mxu0 0.0
    %843 = vmatprep.subr.mxu0 0.0
    %844 = vmatpush1.msra.mxu0 0.0
    %845 = vmatprep.subr.mxu0 0.0
    %846 = vmatpush1.msra.mxu0 0.0
    %847 = vmatprep.subr.mxu0 0.0
    %848 = vmatpush1.msra.mxu0 0.0
    %849 = vmatprep.subr.mxu0 0.0
    %850 = vmatpush1.msra.mxu0 0.0
    %851 = vmatprep.subr.mxu0 0.0
    %852 = vmatpush1.msra.mxu0 0.0
    %853 = vmatprep.subr.mxu0 0.0
    %854 = vmatpush1.msra.mxu0 0.0
    %855 = vmatprep.subr.mxu0 0.0
    %856 = vmatpush1.msra.mxu0 0.0
    %857 = vmatprep.subr.mxu0 0.0
    %858 = vmatpush1.msra.mxu0 0.0
    %859 = vmatprep.subr.mxu0 0.0
    %860 = vmatpush1.msra.mxu0 0.0
    %861 = vmatprep.mubr.f32.mxu0 0.0
    %862 = vmatmul.mubr.f32.gmra.mrb[0].mxu0 %v795
    %v863 = vpop.f32.mrb[0].mxu0
    %v864 = vadd.f32 %v791, %v863
    %v865 = vpop.f32.mrb[0].mxu0
    %866 = vdwg.mxu0
    %v867 = vadd.f32 %v779, %v864
    %v868 = vsub.f32 0.0, %v867
    %v869 = vmul.f32 %v868, 1.442695
    %v870 = vpow.pop %v869
    %v871 = vadd.f32 %v870, 1.0
    %v872 = vrcp.pop %v871
    %v873 = vmul.f32 1.0, %v872
    %875 = vrot.lane.b32.xlu0 %v864, 64
    %v876 = vpop.permute.xlu0 %875
    %v878 = vmul.f32 %v873, %v876
    %880 = vrot.lane.b32.xlu0 %v878, 64
    %v881 = vpop.permute.xlu0 %880
    %v883 = vadd.f32 %v779, %v881
    %v884 = vtanh.pop %v883
    %v885 = vsub.f32 1.0, %v873
    %887 = vrot.lane.b32.xlu0 %v884, 96
    %v888 = vpop.permute.xlu0 %887
    %v890 = vmul.f32 %v885, %v888
    %891 = vrot.lane.b32.xlu0 %v700, 32
    %v892 = vpop.permute.xlu0 %891
    %v894 = vmul.f32 %v873, %v892
    %v895 = vadd.f32 %v890, %v894
    %897 = vrot.lane.b32.xlu0 %v895, 96
    %v898 = vpop.permute.xlu0 %897
    %vm900 = vcmask 254976
    %901 = vst.msk [vmem:[#allocation17] sm:$0x3] %vm900, %v898
    %s902 = scalar_lea.vmem [#allocation13], 2
    %v903 = vld [vmem:[%s902] sm:$0x3]
    %v904 = vld [vmem:[%s14] sm:$0xff]
    %v905 = vld [vmem:[%s14 + $0x8] sm:$0xff]
    %v906 = vld [vmem:[%s14 + $0x10] sm:$0xff]
    %v907 = vld [vmem:[%s14 + $0x18] sm:$0xff]
    %v908 = vld [vmem:[%s16] sm:$0x1]
    %v910 = vlaneseq
    %v911 = vshrl.u32 %v910, 7
    %v912 = vsub.s32 0, %v911
    %v913 = vrot.slane %v908, %v912
    %v915 = vsel %vm793, %v898, 0
    %917 = vmatprep.subr.mxu0 0.0
    %918 = vmatpush1.msra.mxu0 %v904
    %919 = vmatprep.subr.mxu0 0.0
    %920 = vmatpush1.msra.mxu0 %v905
    %921 = vmatprep.subr.mxu0 0.0
    %922 = vmatpush1.msra.mxu0 %v906
    %923 = vmatprep.subr.mxu0 0.0
    %924 = vmatpush1.msra.mxu0 %v907
    %925 = vmatprep.subr.mxu0 0.0
    %926 = vmatpush1.msra.mxu0 0.0
    %927 = vmatprep.subr.mxu0 0.0
    %928 = vmatpush1.msra.mxu0 0.0
    %929 = vmatprep.subr.mxu0 0.0
    %930 = vmatpush1.msra.mxu0 0.0
    %931 = vmatprep.subr.mxu0 0.0
    %932 = vmatpush1.msra.mxu0 0.0
    %933 = vmatprep.subr.mxu0 0.0
    %934 = vmatpush1.msra.mxu0 0.0
    %935 = vmatprep.subr.mxu0 0.0
    %936 = vmatpush1.msra.mxu0 0.0
    %937 = vmatprep.subr.mxu0 0.0
    %938 = vmatpush1.msra.mxu0 0.0
    %939 = vmatprep.subr.mxu0 0.0
    %940 = vmatpush1.msra.mxu0 0.0
    %941 = vmatprep.subr.mxu0 0.0
    %942 = vmatpush1.msra.mxu0 0.0
    %943 = vmatprep.subr.mxu0 0.0
    %944 = vmatpush1.msra.mxu0 0.0
    %945 = vmatprep.subr.mxu0 0.0
    %946 = vmatpush1.msra.mxu0 0.0
    %947 = vmatprep.subr.mxu0 0.0
    %948 = vmatpush1.msra.mxu0 0.0
    %949 = vmatprep.subr.mxu0 0.0
    %950 = vmatpush1.msra.mxu0 0.0
    %951 = vmatprep.subr.mxu0 0.0
    %952 = vmatpush1.msra.mxu0 0.0
    %953 = vmatprep.subr.mxu0 0.0
    %954 = vmatpush1.msra.mxu0 0.0
    %955 = vmatprep.subr.mxu0 0.0
    %956 = vmatpush1.msra.mxu0 0.0
    %957 = vmatprep.subr.mxu0 0.0
    %958 = vmatpush1.msra.mxu0 0.0
    %959 = vmatprep.subr.mxu0 0.0
    %960 = vmatpush1.msra.mxu0 0.0
    %961 = vmatprep.subr.mxu0 0.0
    %962 = vmatpush1.msra.mxu0 0.0
    %963 = vmatprep.subr.mxu0 0.0
    %964 = vmatpush1.msra.mxu0 0.0
    %965 = vmatprep.subr.mxu0 0.0
    %966 = vmatpush1.msra.mxu0 0.0
    %967 = vmatprep.subr.mxu0 0.0
    %968 = vmatpush1.msra.mxu0 0.0
    %969 = vmatprep.subr.mxu0 0.0
    %970 = vmatpush1.msra.mxu0 0.0
    %971 = vmatprep.subr.mxu0 0.0
    %972 = vmatpush1.msra.mxu0 0.0
    %973 = vmatprep.subr.mxu0 0.0
    %974 = vmatpush1.msra.mxu0 0.0
    %975 = vmatprep.subr.mxu0 0.0
    %976 = vmatpush1.msra.mxu0 0.0
    %977 = vmatprep.subr.mxu0 0.0
    %978 = vmatpush1.msra.mxu0 0.0
    %979 = vmatprep.subr.mxu0 0.0
    %980 = vmatpush1.msra.mxu0 0.0
    %981 = vmatprep.mubr.f32.mxu0 0.0
    %982 = vmatmul.mubr.f32.gmra.mrb[0].mxu0 %v915
    %v983 = vpop.f32.mrb[0].mxu0
    %v984 = vadd.f32 %v913, %v983
    %v985 = vpop.f32.mrb[0].mxu0
    %986 = vdwg.mxu0
    %v987 = vld [vmem:[%s15] sm:$0xff]
    %v988 = vld [vmem:[%s15 + $0x8] sm:$0xff]
    %v989 = vld [vmem:[%s15 + $0x10] sm:$0xff]
    %v990 = vld [vmem:[%s15 + $0x18] sm:$0xff]
    %v991 = vld [vmem:[%s17] sm:$0x1]
    %v993 = vlaneseq
    %v994 = vshrl.u32 %v993, 7
    %v995 = vsub.s32 0, %v994
    %v996 = vrot.slane %v991, %v995
    %v999 = vsel %vm793, %v903, 0
    %1001 = vmatprep.subr.mxu0 0.0
    %1002 = vmatpush1.msra.mxu0 %v987
    %1003 = vmatprep.subr.mxu0 0.0
    %1004 = vmatpush1.msra.mxu0 %v988
    %1005 = vmatprep.subr.mxu0 0.0
    %1006 = vmatpush1.msra.mxu0 %v989
    %1007 = vmatprep.subr.mxu0 0.0
    %1008 = vmatpush1.msra.mxu0 %v990
    %1009 = vmatprep.subr.mxu0 0.0
    %1010 = vmatpush1.msra.mxu0 0.0
    %1011 = vmatprep.subr.mxu0 0.0
    %1012 = vmatpush1.msra.mxu0 0.0
    %1013 = vmatprep.subr.mxu0 0.0
    %1014 = vmatpush1.msra.mxu0 0.0
    %1015 = vmatprep.subr.mxu0 0.0
    %1016 = vmatpush1.msra.mxu0 0.0
    %1017 = vmatprep.subr.mxu0 0.0
    %1018 = vmatpush1.msra.mxu0 0.0
    %1019 = vmatprep.subr.mxu0 0.0
    %1020 = vmatpush1.msra.mxu0 0.0
    %1021 = vmatprep.subr.mxu0 0.0
    %1022 = vmatpush1.msra.mxu0 0.0
    %1023 = vmatprep.subr.mxu0 0.0
    %1024 = vmatpush1.msra.mxu0 0.0
    %1025 = vmatprep.subr.mxu0 0.0
    %1026 = vmatpush1.msra.mxu0 0.0
    %1027 = vmatprep.subr.mxu0 0.0
    %1028 = vmatpush1.msra.mxu0 0.0
    %1029 = vmatprep.subr.mxu0 0.0
    %1030 = vmatpush1.msra.mxu0 0.0
    %1031 = vmatprep.subr.mxu0 0.0
    %1032 = vmatpush1.msra.mxu0 0.0
    %1033 = vmatprep.subr.mxu0 0.0
    %1034 = vmatpush1.msra.mxu0 0.0
    %1035 = vmatprep.subr.mxu0 0.0
    %1036 = vmatpush1.msra.mxu0 0.0
    %1037 = vmatprep.subr.mxu0 0.0
    %1038 = vmatpush1.msra.mxu0 0.0
    %1039 = vmatprep.subr.mxu0 0.0
    %1040 = vmatpush1.msra.mxu0 0.0
    %1041 = vmatprep.subr.mxu0 0.0
    %1042 = vmatpush1.msra.mxu0 0.0
    %1043 = vmatprep.subr.mxu0 0.0
    %1044 = vmatpush1.msra.mxu0 0.0
    %1045 = vmatprep.subr.mxu0 0.0
    %1046 = vmatpush1.msra.mxu0 0.0
    %1047 = vmatprep.subr.mxu0 0.0
    %1048 = vmatpush1.msra.mxu0 0.0
    %1049 = vmatprep.subr.mxu0 0.0
    %1050 = vmatpush1.msra.mxu0 0.0
    %1051 = vmatprep.subr.mxu0 0.0
    %1052 = vmatpush1.msra.mxu0 0.0
    %1053 = vmatprep.subr.mxu0 0.0
    %1054 = vmatpush1.msra.mxu0 0.0
    %1055 = vmatprep.subr.mxu0 0.0
    %1056 = vmatpush1.msra.mxu0 0.0
    %1057 = vmatprep.subr.mxu0 0.0
    %1058 = vmatpush1.msra.mxu0 0.0
    %1059 = vmatprep.subr.mxu0 0.0
    %1060 = vmatpush1.msra.mxu0 0.0
    %1061 = vmatprep.subr.mxu0 0.0
    %1062 = vmatpush1.msra.mxu0 0.0
    %1063 = vmatprep.subr.mxu0 0.0
    %1064 = vmatpush1.msra.mxu0 0.0
    %1065 = vmatprep.mubr.f32.mxu0 0.0
    %1066 = vmatmul.mubr.f32.gmra.mrb[0].mxu0 %v999
    %v1067 = vpop.f32.mrb[0].mxu0
    %v1068 = vadd.f32 %v996, %v1067
    %v1069 = vpop.f32.mrb[0].mxu0
    %1070 = vdwg.mxu0
    %v1071 = vadd.f32 %v984, %v1068
    %v1072 = vsub.f32 0.0, %v1071
    %v1073 = vmul.f32 %v1072, 1.442695
    %v1074 = vpow.pop %v1073
    %v1075 = vadd.f32 %v1074, 1.0
    %v1076 = vrcp.pop %v1075
    %v1077 = vmul.f32 1.0, %v1076
    %1079 = vrot.lane.b32.xlu0 %v1068, 64
    %v1080 = vpop.permute.xlu0 %1079
    %v1082 = vmul.f32 %v1077, %v1080
    %1084 = vrot.lane.b32.xlu0 %v1082, 64
    %v1085 = vpop.permute.xlu0 %1084
    %v1087 = vadd.f32 %v984, %v1085
    %v1088 = vtanh.pop %v1087
    %v1089 = vsub.f32 1.0, %v1077
    %1091 = vrot.lane.b32.xlu0 %v1088, 96
    %v1092 = vpop.permute.xlu0 %1091
    %v1094 = vmul.f32 %v1089, %v1092
    %1095 = vrot.lane.b32.xlu0 %v903, 32
    %v1096 = vpop.permute.xlu0 %1095
    %v1098 = vmul.f32 %v1077, %v1096
    %v1099 = vadd.f32 %v1094, %v1098
    %1101 = vrot.lane.b32.xlu0 %v1099, 96
    %v1102 = vpop.permute.xlu0 %1101
    %s1104 = scalar_lea.vmem [#allocation17], 2
    %1105 = vst.msk [vmem:[%s1104] sm:$0x3] %vm900, %v1102
    %v1106 = vld [vmem:[%s18] sm:$0xff]
    %v1107 = vld [vmem:[%s18 + $0x8] sm:$0xff]
    %v1108 = vld [vmem:[%s18 + $0x10] sm:$0xff]
    %v1109 = vld [vmem:[%s18 + $0x18] sm:$0xff]
    %v1110 = vld [vmem:[%s19] sm:$0x1]
    %v1112 = vlaneseq
    %v1113 = vshrl.u32 %v1112, 7
    %v1114 = vsub.s32 0, %v1113
    %v1115 = vrot.slane %v1110, %v1114
    %v1117 = vsel %vm793, %v1102, 0
    %1119 = vmatprep.subr.mxu0 0.0
    %1120 = vmatpush1.msra.mxu0 %v1106
    %1121 = vmatprep.subr.mxu0 0.0
    %1122 = vmatpush1.msra.mxu0 %v1107
    %1123 = vmatprep.subr.mxu0 0.0
    %1124 = vmatpush1.msra.mxu0 %v1108
    %1125 = vmatprep.subr.mxu0 0.0
    %1126 = vmatpush1.msra.mxu0 %v1109
    %1127 = vmatprep.subr.mxu0 0.0
    %1128 = vmatpush1.msra.mxu0 0.0
    %1129 = vmatprep.subr.mxu0 0.0
    %1130 = vmatpush1.msra.mxu0 0.0
    %1131 = vmatprep.subr.mxu0 0.0
    %1132 = vmatpush1.msra.mxu0 0.0
    %1133 = vmatprep.subr.mxu0 0.0
    %1134 = vmatpush1.msra.mxu0 0.0
    %1135 = vmatprep.subr.mxu0 0.0
    %1136 = vmatpush1.msra.mxu0 0.0
    %1137 = vmatprep.subr.mxu0 0.0
    %1138 = vmatpush1.msra.mxu0 0.0
    %1139 = vmatprep.subr.mxu0 0.0
    %1140 = vmatpush1.msra.mxu0 0.0
    %1141 = vmatprep.subr.mxu0 0.0
    %1142 = vmatpush1.msra.mxu0 0.0
    %1143 = vmatprep.subr.mxu0 0.0
    %1144 = vmatpush1.msra.mxu0 0.0
    %1145 = vmatprep.subr.mxu0 0.0
    %1146 = vmatpush1.msra.mxu0 0.0
    %1147 = vmatprep.subr.mxu0 0.0
    %1148 = vmatpush1.msra.mxu0 0.0
    %1149 = vmatprep.subr.mxu0 0.0
    %1150 = vmatpush1.msra.mxu0 0.0
    %1151 = vmatprep.subr.mxu0 0.0
    %1152 = vmatpush1.msra.mxu0 0.0
    %1153 = vmatprep.subr.mxu0 0.0
    %1154 = vmatpush1.msra.mxu0 0.0
    %1155 = vmatprep.subr.mxu0 0.0
    %1156 = vmatpush1.msra.mxu0 0.0
    %1157 = vmatprep.subr.mxu0 0.0
    %1158 = vmatpush1.msra.mxu0 0.0
    %1159 = vmatprep.subr.mxu0 0.0
    %1160 = vmatpush1.msra.mxu0 0.0
    %1161 = vmatprep.subr.mxu0 0.0
    %1162 = vmatpush1.msra.mxu0 0.0
    %1163 = vmatprep.subr.mxu0 0.0
    %1164 = vmatpush1.msra.mxu0 0.0
    %1165 = vmatprep.subr.mxu0 0.0
    %1166 = vmatpush1.msra.mxu0 0.0
    %1167 = vmatprep.subr.mxu0 0.0
    %1168 = vmatpush1.msra.mxu0 0.0
    %1169 = vmatprep.subr.mxu0 0.0
    %1170 = vmatpush1.msra.mxu0 0.0
    %1171 = vmatprep.subr.mxu0 0.0
    %1172 = vmatpush1.msra.mxu0 0.0
    %1173 = vmatprep.subr.mxu0 0.0
    %1174 = vmatpush1.msra.mxu0 0.0
    %1175 = vmatprep.subr.mxu0 0.0
    %1176 = vmatpush1.msra.mxu0 0.0
    %1177 = vmatprep.subr.mxu0 0.0
    %1178 = vmatpush1.msra.mxu0 0.0
    %1179 = vmatprep.subr.mxu0 0.0
    %1180 = vmatpush1.msra.mxu0 0.0
    %1181 = vmatprep.subr.mxu0 0.0
    %1182 = vmatpush1.msra.mxu0 0.0
    %1183 = vmatprep.mubr.f32.mxu0 0.0
    %1184 = vmatmul.mubr.f32.gmra.mrb[0].mxu0 %v1117
    %v1185 = vpop.f32.mrb[0].mxu0
    %v1186 = vadd.f32 %v1115, %v1185
    %v1187 = vpop.f32.mrb[0].mxu0
    %1188 = vdwg.mxu0
    %vm1189 = vcmask 41984
    %v1190 = vsel %vm1189, %v1186, -inf
    %1191 = vmax.xlane.f32.xlu0 %v1190
    %v1192 = vpop.xlane.xlu0 %1191
    %v1193 = vsub.f32 %v1186, %v1192
    %v1194 = vmul.f32 %v1193, 1.442695
    %v1195 = vpow.pop %v1194
    %v1196 = vsel %vm1189, %v1195, 0.0
    %1197 = vadd.xlane.f32.xlu0 %v1196
    %v1198 = vpop.xlane.xlu0 %1197
    %v1199 = vrcp.pop %v1198
    %v1200 = vmul.f32 %v1195, %v1199
    %1201 = vst.msk [vmem:[#allocation16] sm:$0x3] %vm1189, %v1200
    // Predicated region
    $region114: #{tpu_custom_call.1} parent=1 // pred_check
      _
    $region115: #{tpu_custom_call.1} parent=1 // pred_check_branch
      %1203 = sbr.rel (0) target = $region117
    $region116: #{tpu_custom_call.1} parent=1 // pred_region
      %s1205 = ssub.s32 32, 32
      %1206 = vsyncadd [#allocation4], %s1205
      %s1208 = sshll.u32 [#allocation16], 4
      %s1209 = int_to_ptr.vmem [resolvable:$true] %s1208
      %1211 = dma.vmem_to_hbm [thread:$0]  %s1209, 32, %s20, [#allocation4]
    $region117: #{tpu_custom_call.1} parent=1 // pred_fallthru
      _
    // Predicated region
    $region118: #{tpu_custom_call.1} parent=1 // pred_check
      _
    $region119: #{tpu_custom_call.1} parent=1 // pred_check_branch
      %1213 = sbr.rel (0) target = $region121
    $region120: #{tpu_custom_call.1} parent=1 // pred_region
      %s1215 = ssub.s32 64, 64
      %1216 = vsyncadd [#allocation18], %s1215
      %s1217 = sshll.u32 [#allocation17], 4
      %s1218 = int_to_ptr.vmem [resolvable:$true] %s1217
      %1223 = dma.vmem_to_hbm [thread:$0]  %s1218, 64, %s21, [#allocation18], 32, 32, 2
    $region121: #{tpu_custom_call.1} parent=1 // pred_fallthru
      _
    // Predicated region
    $region122: #{tpu_custom_call.1} parent=1 // pred_check
      _
    $region123: #{tpu_custom_call.1} parent=1 // pred_check_branch
      %1225 = sbr.rel (0) target = $region125
    $region124: #{tpu_custom_call.1} parent=1 // pred_region
      %1226 = dma.done [#allocation4], 32
    $region125: #{tpu_custom_call.1} parent=1 // pred_fallthru
      _
    // Predicated region
    $region126: #{tpu_custom_call.1} parent=1 // pred_check
      _
    $region127: #{tpu_custom_call.1} parent=1 // pred_check_branch
      %1228 = sbr.rel (0) target = $region129
    $region128: #{tpu_custom_call.1} parent=1 // pred_region
      %1229 = dma.done [#allocation18], 64
    $region129: #{tpu_custom_call.1} parent=1 // pred_fallthru
      _
    %1230 = vsyncpa [#allocation3], 1
    %1231 = vsyncpa [#allocation6], 1
    %1232 = vsyncpa [#allocation9], 1
    %1233 = vsyncpa [#allocation12], 1
    %1234 = vsyncpa [#allocation15], 1
    %1235 = vsyncpa [#allocation4], 1
    %1236 = vsyncpa [#allocation18], 1

</llo_original>
